<compile_context>
chip_gen: v5e
topology: v5e:2x2
jax: 0.10.0
libtpu: 0.0.40
codegen_flags: <defaults>
</compile_context>

<pallas_src>
import math
import functools

import jax
import jax.numpy as jnp
from jax import lax
from jax.experimental import pallas as pl
from jax.experimental.pallas import tpu as pltpu


def _bert_attention_kernel(x_ref, mask_ref,
                           wq_ref, bq_ref, wk_ref, bk_ref, wv_ref, bv_ref,
                           wo_ref, bo_ref, gamma_ref, beta_ref,
                           o_ref, k_scr, v_scr,
                           *, num_heads, head_dim, eps):
    """One (batch, q-tile) grid step.

    x_ref    : (S, H)   full-sequence activations of this batch (native dtype)
    mask_ref : (1, S)   additive attention-mask row of this batch
    o_ref    : (TQ, H)  output tile
    k_scr/v_scr : (NH, S, dH) persistent per-batch K/V scratch, head-major layout
    """
    qi = pl.program_id(1)
    S, H = x_ref.shape
    TQ = o_ref.shape[0]
    NH, dH = num_heads, head_dim
    dtype = x_ref.dtype                       # native MXU operand dtype

    # x @ W.T with PyTorch-layout (out, in) weights: contract dim 1 with dim 1.
    dn_t = (((1,), (1,)), ((), ()))

    def linear(x, w_ref, b_ref):
        y = lax.dot_general(x, w_ref[...], dimension_numbers=dn_t,
                            preferred_element_type=jnp.float32)
        return y + b_ref[...].astype(jnp.float32)          # f32 accumulate + bias

    # --- K/V projections: once per batch, reused by every q-tile of this batch. ---
    @pl.when(qi == 0)
    def _():
        xf = x_ref[...]                                                  # (S, H)
        k = linear(xf, wk_ref, bk_ref).astype(dtype)
        v = linear(xf, wv_ref, bv_ref).astype(dtype)
        k_scr[...] = k.reshape(S, NH, dH).transpose(1, 0, 2)             # (NH, S, dH)
        v_scr[...] = v.reshape(S, NH, dH).transpose(1, 0, 2)

    # --- Q projection for this tile; fold 1/sqrt(dH) into q (incl. bias: correct). ---
    q_start = pl.multiple_of(qi * TQ, TQ)
    xq = x_ref[pl.ds(q_start, TQ), :]                                    # (TQ, H)
    q = linear(xq, wq_ref, bq_ref) * (1.0 / math.sqrt(dH))               # f32
    q_h = q.astype(dtype).reshape(TQ, NH, dH).transpose(1, 0, 2)         # (NH, TQ, dH)

    # --- Batched-per-head attention (head dim is the dot_general batch dim). ---
    k_h = k_scr[...]                                                     # (NH, S, dH)
    v_h = v_scr[...]
    s = lax.dot_general(q_h, k_h,
                        dimension_numbers=(((2,), (2,)), ((0,), (0,))),
                        preferred_element_type=jnp.float32)              # (NH, TQ, S)
    s = s + mask_ref[...].astype(jnp.float32)                            # (1, S) broadcast
    s = s - jnp.max(s, axis=-1, keepdims=True)                           # stable softmax
    p = jnp.exp(s)
    p = p * pl.reciprocal(jnp.sum(p, axis=-1, keepdims=True), approx=True)
    # TODO(synk): attention_probs dropout is identity in eval/inference mode.
    ctx = lax.dot_general(p.astype(dtype), v_h,
                          dimension_numbers=(((2,), (1,)), ((0,), (0,))),
                          preferred_element_type=jnp.float32)            # (NH, TQ, dH)
    ctx = ctx.transpose(1, 0, 2).reshape(TQ, H)                          # (TQ, H)

    # --- Output projection + residual + LayerNorm (all math in f32). ---
    out = lax.dot_general(ctx.astype(dtype), wo_ref[...], dimension_numbers=dn_t,
                          preferred_element_type=jnp.float32)
    out = out + bo_ref[...].astype(jnp.float32)
    # TODO(synk): hidden_dropout is identity in eval/inference mode.
    y = out + xq.astype(jnp.float32)
    mu = jnp.mean(y, axis=-1, keepdims=True)
    var = jnp.mean(jnp.square(y - mu), axis=-1, keepdims=True)
    y = (y - mu) * lax.rsqrt(var + eps)
    y = y * gamma_ref[...].astype(jnp.float32) + beta_ref[...].astype(jnp.float32)
    o_ref[...] = y.astype(o_ref.dtype)


def bert_attention(hidden_states, attention_mask, params, *,
                   num_heads, eps=1e-12, block_q=256):
    """hidden_states: (B, S, H); attention_mask: (B, 1, 1, S) additive mask;
    params: (Wq, bq, Wk, bk, Wv, bv, Wo, bo, gamma, beta) in PyTorch (out, in) layout."""
    wq, bq, wk, bk, wv, bv, wo, bo, gamma, beta = params
    B, S, H = hidden_states.shape
    assert H % num_heads == 0
    head_dim = H // num_heads
    TQ = min(block_q, S)
    assert S % TQ == 0, "sequence length must be divisible by the q-tile size"
    nq = S // TQ

    row = lambda a: a.reshape(1, H)                                     # cheap glue reshape
    kernel = functools.partial(_bert_attention_kernel,
                               num_heads=num_heads, head_dim=head_dim, eps=eps)

    const2d = lambda b, qi: (0, 0)
    # Weights never change block index -> single-buffer them (double-buffering a
    # constant-index block is pure VMEM waste: 9 MiB -> 18 MiB for BERT-base f32).
    w_spec = pl.BlockSpec((H, H), const2d, pipeline_mode=pl.Buffered(1))
    v_spec = pl.BlockSpec((1, H), const2d)                              # biases / LN params

    grid_spec = pltpu.PrefetchScalarGridSpec(
        num_scalar_prefetch=0,
        grid=(B, nq),
        in_specs=[
            # Full-sequence activations for this batch (K/V projection + q-tile slice).
            pl.BlockSpec((pl.Squeezed(), S, H), lambda b, qi: (b, 0, 0)),
            # Additive mask (B, 1, 1, S) -> kernel sees a (1, S) row.
            pl.BlockSpec((pl.Squeezed(), pl.Squeezed(), 1, S),
                         lambda b, qi: (b, 0, 0, 0)),
            w_spec, v_spec,          # Wq, bq
            w_spec, v_spec,          # Wk, bk
            w_spec, v_spec,          # Wv, bv
            w_spec, v_spec,          # Wo, bo
            v_spec, v_spec,          # gamma, beta
        ],
        out_specs=pl.BlockSpec((pl.Squeezed(), TQ, H), lambda b, qi: (b, qi, 0)),
        scratch_shapes=[
            pltpu.VMEM((num_heads, S, head_dim), hidden_states.dtype),   # K heads
            pltpu.VMEM((num_heads, S, head_dim), hidden_states.dtype),   # V heads
        ],
    )

    return pl.pallas_call(
        kernel,
        out_shape=jax.ShapeDtypeStruct((B, S, H), hidden_states.dtype),
        grid_spec=grid_spec,
        compiler_params=pltpu.CompilerParams(
            dimension_semantics=("parallel", "arbitrary"),
            vmem_limit_bytes=64 * 1024 * 1024),
    )(hidden_states, attention_mask,
      wq, row(bq), wk, row(bk), wv, row(bv), wo, row(bo),
      row(gamma), row(beta))


def reference_bert_attention(hidden_states, attention_mask, params, *, num_heads, eps=1e-12):
    wq, bq, wk, bk, wv, bv, wo, bo, gamma, beta = params
    B, S, H = hidden_states.shape
    dH = H // num_heads

    def lin(x, w, b):
        return jnp.einsum('bsh,oh->bso', x, w) + b

    def split(x):
        return x.reshape(B, S, num_heads, dH).transpose(0, 2, 1, 3)

    q = split(lin(hidden_states, wq, bq))
    k = split(lin(hidden_states, wk, bk))
    v = split(lin(hidden_states, wv, bv))
    scores = jnp.einsum('bhqd,bhkd->bhqk', q, k) / math.sqrt(dH)
    scores = scores + attention_mask
    probs = jax.nn.softmax(scores, axis=-1)
    ctx = jnp.einsum('bhqk,bhkd->bhqd', probs, v)
    ctx = ctx.transpose(0, 2, 1, 3).reshape(B, S, H)
    out = lin(ctx, wo, bo)
    y = out + hidden_states
    mu = y.mean(-1, keepdims=True)
    var = jnp.mean((y - mu) ** 2, axis=-1, keepdims=True)
    return (y - mu) / jnp.sqrt(var + eps) * gamma + beta


if __name__ == "__main__":
    def make_inputs(B, S, H):
        key = jax.random.PRNGKey(0)
        keys = jax.random.split(key, 9)
        hs = jax.random.normal(keys[0], (B, S, H), jnp.float32)
        bound = 1.0 / math.sqrt(H)

        def u(k, shape):
            return jax.random.uniform(k, shape, jnp.float32, -bound, bound)

        wq, wk, wv, wo = u(keys[1], (H, H)), u(keys[2], (H, H)), u(keys[3], (H, H)), u(keys[4], (H, H))
        bq, bk, bv, bo = u(keys[5], (H,)), u(keys[6], (H,)), u(keys[7], (H,)), u(keys[8], (H,))
        gamma = jnp.ones((H,), jnp.float32)
        beta = jnp.zeros((H,), jnp.float32)
        params = (wq, bq, wk, bk, wv, bv, wo, bo, gamma, beta)

        # Standard BERT extended attention mask (B, 1, 1, S): 0 = attend, -10000 = masked.
        pad = jnp.zeros((B, S), jnp.float32).at[1, S - 2:].set(1.0)
        mask = (pad * -10000.0).reshape(B, 1, 1, S)
        return hs, mask, params

    def run_case(B, S, H, NH, dtype, block_q, atol, rtol):
        hs, mask, params = make_inputs(B, S, H)
        hs_c = hs.astype(dtype)
        params_c = list(params)
        for i in (0, 2, 4, 6):                       # matmul weights in the compute dtype
            params_c[i] = params_c[i].astype(dtype)
        out = bert_attention(hs_c, mask, tuple(params_c),
                             num_heads=NH, eps=1e-12, block_q=block_q)
        out = jax.block_until_ready(out)
        ref = reference_bert_attention(hs, mask, params, num_heads=NH, eps=1e-12)
        assert out.shape == (B, S, H)
        out_f32 = out.astype(jnp.float32)
        err = float(jnp.max(jnp.abs(out_f32 - ref)))
        assert jnp.allclose(out_f32, ref, atol=atol, rtol=rtol), err

    # Small config-consistent shapes (hidden=32, 4 heads -> head_dim=8).
    run_case(2, 8, 32, 4, jnp.float32, 256, 2e-2, 2e-2)    # single q-tile
    run_case(2, 16, 32, 4, jnp.float32, 8, 2e-2, 2e-2)     # two q-tiles: K/V scratch reuse
    run_case(2, 16, 32, 4, jnp.bfloat16, 8, 3e-1, 5e-2)    # bf16 MXU-operand path

    print("KERNEL_OK")
</pallas_src>

<mosaic_0001>
module attributes {stable_mosaic.version = 11 : i64} {
  func.func @_bert_attention_kernel(%arg0: i32, %arg1: i32, %arg2: memref<1x8x32xf32, #tpu.memory_space<vmem>>, %arg3: memref<1x1x1x8xf32, #tpu.memory_space<vmem>>, %arg4: memref<32x32xf32, #tpu.memory_space<vmem>>, %arg5: memref<1x32xf32, #tpu.memory_space<vmem>>, %arg6: memref<32x32xf32, #tpu.memory_space<vmem>>, %arg7: memref<1x32xf32, #tpu.memory_space<vmem>>, %arg8: memref<32x32xf32, #tpu.memory_space<vmem>>, %arg9: memref<1x32xf32, #tpu.memory_space<vmem>>, %arg10: memref<32x32xf32, #tpu.memory_space<vmem>>, %arg11: memref<1x32xf32, #tpu.memory_space<vmem>>, %arg12: memref<1x32xf32, #tpu.memory_space<vmem>>, %arg13: memref<1x32xf32, #tpu.memory_space<vmem>>, %arg14: memref<1x8x32xf32, #tpu.memory_space<vmem>>, %arg15: memref<4x8x8xf32, #tpu.memory_space<vmem>>, %arg16: memref<4x8x8xf32, #tpu.memory_space<vmem>>) attributes {dimension_semantics = [#tpu.dimension_semantics<parallel>, #tpu.dimension_semantics<arbitrary>], iteration_bounds = array<i64: 2, 1>, scalar_prefetch = 0 : i64, scratch_operands = 2 : i64, tpu.core_type = #tpu.core_type<tc>, window_params = [{transform_indices = @transform_0, window_bounds = array<i64: 1, 8, 32>}, {transform_indices = @transform_1, window_bounds = array<i64: 1, 1, 1, 8>}, {pipeline_mode = #tpu.pipeline_mode<synchronous>, transform_indices = @transform_2, window_bounds = array<i64: 32, 32>}, {pipeline_mode = #tpu.pipeline_mode<synchronous>, transform_indices = @transform_3, window_bounds = array<i64: 1, 32>}, {pipeline_mode = #tpu.pipeline_mode<synchronous>, transform_indices = @transform_4, window_bounds = array<i64: 32, 32>}, {pipeline_mode = #tpu.pipeline_mode<synchronous>, transform_indices = @transform_5, window_bounds = array<i64: 1, 32>}, {pipeline_mode = #tpu.pipeline_mode<synchronous>, transform_indices = @transform_6, window_bounds = array<i64: 32, 32>}, {pipeline_mode = #tpu.pipeline_mode<synchronous>, transform_indices = @transform_7, window_bounds = array<i64: 1, 32>}, {pipeline_mode = #tpu.pipeline_mode<synchronous>, transform_indices = @transform_8, window_bounds = array<i64: 32, 32>}, {pipeline_mode = #tpu.pipeline_mode<synchronous>, transform_indices = @transform_9, window_bounds = array<i64: 1, 32>}, {pipeline_mode = #tpu.pipeline_mode<synchronous>, transform_indices = @transform_10, window_bounds = array<i64: 1, 32>}, {pipeline_mode = #tpu.pipeline_mode<synchronous>, transform_indices = @transform_11, window_bounds = array<i64: 1, 32>}, {transform_indices = @transform_12, window_bounds = array<i64: 1, 8, 32>}]} {
    %c0_i32 = arith.constant 0 : i32
    %0 = arith.cmpi eq, %arg1, %c0_i32 : i32
    %1 = arith.extui %0 : i1 to i32
    %c0_i32_0 = arith.constant 0 : i32
    %2 = arith.cmpi ne, %1, %c0_i32_0 : i32
    scf.if %2 {
      %c0_38 = arith.constant 0 : index
      %c0_39 = arith.constant 0 : index
      %c0_40 = arith.constant 0 : index
      %71 = vector.load %arg2[%c0_38, %c0_39, %c0_40] : memref<1x8x32xf32, #tpu.memory_space<vmem>>, vector<1x8x32xf32>
      %72 = vector.shape_cast %71 : vector<1x8x32xf32> to vector<8x32xf32>
      %c0_41 = arith.constant 0 : index
      %c0_42 = arith.constant 0 : index
      %73 = vector.load %arg6[%c0_41, %c0_42] : memref<32x32xf32, #tpu.memory_space<vmem>>, vector<32x32xf32>
      %cst_43 = arith.constant dense<0.000000e+00> : vector<8x32xf32>
      %74 = tpu.matmul %72, %73, %cst_43 {dimension_numbers = #tpu.dot_dimension_numbers<[1], [1], [0], [0], [0, 0, 1, 0], [], []>} : vector<8x32xf32>, vector<32x32xf32>, vector<8x32xf32> -> vector<8x32xf32>
      %c0_44 = arith.constant 0 : index
      %c0_45 = arith.constant 0 : index
      %75 = vector.load %arg7[%c0_44, %c0_45] : memref<1x32xf32, #tpu.memory_space<vmem>>, vector<1x32xf32>
      %76 = vector.broadcast %75 : vector<1x32xf32> to vector<8x32xf32>
      %77 = arith.addf %74, %76 : vector<8x32xf32>
      %c0_46 = arith.constant 0 : index
      %c0_47 = arith.constant 0 : index
      %78 = vector.load %arg8[%c0_46, %c0_47] : memref<32x32xf32, #tpu.memory_space<vmem>>, vector<32x32xf32>
      %cst_48 = arith.constant dense<0.000000e+00> : vector<8x32xf32>
      %79 = tpu.matmul %72, %78, %cst_48 {dimension_numbers = #tpu.dot_dimension_numbers<[1], [1], [0], [0], [0, 0, 1, 0], [], []>} : vector<8x32xf32>, vector<32x32xf32>, vector<8x32xf32> -> vector<8x32xf32>
      %c0_49 = arith.constant 0 : index
      %c0_50 = arith.constant 0 : index
      %80 = vector.load %arg9[%c0_49, %c0_50] : memref<1x32xf32, #tpu.memory_space<vmem>>, vector<1x32xf32>
      %81 = vector.broadcast %80 : vector<1x32xf32> to vector<8x32xf32>
      %82 = arith.addf %79, %81 : vector<8x32xf32>
      %83 = vector.shape_cast %77 : vector<8x32xf32> to vector<8x4x8xf32>
      %84 = tpu.transpose %83, [1, 0, 2] : vector<8x4x8xf32> -> vector<4x8x8xf32>
      %c0_51 = arith.constant 0 : index
      %c0_52 = arith.constant 0 : index
      %c0_53 = arith.constant 0 : index
      %85 = vector.load %arg15[%c0_51, %c0_52, %c0_53] : memref<4x8x8xf32, #tpu.memory_space<vmem>>, vector<4x8x8xf32>
      tpu.vector_store %arg15[%c0_51, %c0_52, %c0_53], %84 {strides = array<i32>} : memref<4x8x8xf32, #tpu.memory_space<vmem>>, vector<4x8x8xf32>,
      %86 = vector.shape_cast %82 : vector<8x32xf32> to vector<8x4x8xf32>
      %87 = tpu.transpose %86, [1, 0, 2] : vector<8x4x8xf32> -> vector<4x8x8xf32>
      %c0_54 = arith.constant 0 : index
      %c0_55 = arith.constant 0 : index
      %c0_56 = arith.constant 0 : index
      %88 = vector.load %arg16[%c0_54, %c0_55, %c0_56] : memref<4x8x8xf32, #tpu.memory_space<vmem>>, vector<4x8x8xf32>
      tpu.vector_store %arg16[%c0_54, %c0_55, %c0_56], %87 {strides = array<i32>} : memref<4x8x8xf32, #tpu.memory_space<vmem>>, vector<4x8x8xf32>,
    } else {
    }
    %c8_i32 = arith.constant 8 : i32
    %3 = arith.muli %arg1, %c8_i32 : i32
    %4 = tpu.assume_multiple %3, 8 : i32
    %c0 = arith.constant 0 : index
    %5 = arith.index_cast %4 : i32 to index
    %c0_1 = arith.constant 0 : index
    %6 = vector.load %arg2[%c0, %5, %c0_1] : memref<1x8x32xf32, #tpu.memory_space<vmem>>, vector<1x8x32xf32>
    %7 = vector.shape_cast %6 : vector<1x8x32xf32> to vector<8x32xf32>
    %c0_2 = arith.constant 0 : index
    %c0_3 = arith.constant 0 : index
    %8 = vector.load %arg4[%c0_2, %c0_3] : memref<32x32xf32, #tpu.memory_space<vmem>>, vector<32x32xf32>
    %cst = arith.constant dense<0.000000e+00> : vector<8x32xf32>
    %9 = tpu.matmul %7, %8, %cst {dimension_numbers = #tpu.dot_dimension_numbers<[1], [1], [0], [0], [0, 0, 1, 0], [], []>} : vector<8x32xf32>, vector<32x32xf32>, vector<8x32xf32> -> vector<8x32xf32>
    %c0_4 = arith.constant 0 : index
    %c0_5 = arith.constant 0 : index
    %10 = vector.load %arg5[%c0_4, %c0_5] : memref<1x32xf32, #tpu.memory_space<vmem>>, vector<1x32xf32>
    %11 = vector.broadcast %10 : vector<1x32xf32> to vector<8x32xf32>
    %12 = arith.addf %9, %11 : vector<8x32xf32>
    %cst_6 = arith.constant 0.353553385 : f32
    %13 = vector.broadcast %cst_6 : f32 to vector<8x32xf32>
    %14 = arith.mulf %12, %13 : vector<8x32xf32>
    %15 = vector.shape_cast %14 : vector<8x32xf32> to vector<8x4x8xf32>
    %16 = tpu.transpose %15, [1, 0, 2] : vector<8x4x8xf32> -> vector<4x8x8xf32>
    %c0_7 = arith.constant 0 : index
    %c0_8 = arith.constant 0 : index
    %c0_9 = arith.constant 0 : index
    %17 = vector.load %arg15[%c0_7, %c0_8, %c0_9] : memref<4x8x8xf32, #tpu.memory_space<vmem>>, vector<4x8x8xf32>
    %c0_10 = arith.constant 0 : index
    %c0_11 = arith.constant 0 : index
    %c0_12 = arith.constant 0 : index
    %18 = vector.load %arg16[%c0_10, %c0_11, %c0_12] : memref<4x8x8xf32, #tpu.memory_space<vmem>>, vector<4x8x8xf32>
    %cst_13 = arith.constant dense<0.000000e+00> : vector<4x8x8xf32>
    %19 = tpu.matmul %16, %17, %cst_13 {dimension_numbers = #tpu.dot_dimension_numbers<[2], [2], [1], [1], [0, 0, 0, 1, 1, 1], [0], [0]>} : vector<4x8x8xf32>, vector<4x8x8xf32>, vector<4x8x8xf32> -> vector<4x8x8xf32>
    %c0_14 = arith.constant 0 : index
    %c0_15 = arith.constant 0 : index
    %c0_16 = arith.constant 0 : index
    %c0_17 = arith.constant 0 : index
    %20 = vector.load %arg3[%c0_14, %c0_15, %c0_16, %c0_17] : memref<1x1x1x8xf32, #tpu.memory_space<vmem>>, vector<1x1x1x8xf32>
    %21 = vector.shape_cast %20 : vector<1x1x1x8xf32> to vector<1x8xf32>
    %22 = vector.shape_cast %21 : vector<1x8xf32> to vector<1x1x8xf32>
    %23 = vector.broadcast %22 : vector<1x1x8xf32> to vector<4x8x8xf32>
    %24 = arith.addf %19, %23 : vector<4x8x8xf32>
    %cst_18 = arith.constant dense<0xFF800000> : vector<4x8xf32>
    %25 = vector.multi_reduction <maximumf>, %24, %cst_18 [2] : vector<4x8x8xf32> to vector<4x8xf32>
    %26 = vector.shape_cast %25 : vector<4x8xf32> to vector<4x8x1xf32>
    %27 = vector.broadcast %26 : vector<4x8x1xf32> to vector<4x8x8xf32>
    %28 = arith.subf %24, %27 : vector<4x8x8xf32>
    %29 = math.exp %28 : vector<4x8x8xf32>
    %cst_19 = arith.constant dense<0.000000e+00> : vector<4x8xf32>
    %30 = vector.multi_reduction <add>, %29, %cst_19 [2] : vector<4x8x8xf32> to vector<4x8xf32>
    %31 = vector.shape_cast %30 : vector<4x8xf32> to vector<4x8x1xf32>
    %32 = tpu.reciprocal %31 {approx = true} : vector<4x8x1xf32> -> vector<4x8x1xf32>
    %33 = vector.broadcast %32 : vector<4x8x1xf32> to vector<4x8x8xf32>
    %34 = arith.mulf %29, %33 : vector<4x8x8xf32>
    %cst_20 = arith.constant dense<0.000000e+00> : vector<4x8x8xf32>
    %35 = tpu.matmul %34, %18, %cst_20 {dimension_numbers = #tpu.dot_dimension_numbers<[2], [1], [1], [2], [0, 0, 0, 1, 1, 2], [0], [0]>} : vector<4x8x8xf32>, vector<4x8x8xf32>, vector<4x8x8xf32> -> vector<4x8x8xf32>
    %36 = tpu.transpose %35, [1, 0, 2] : vector<4x8x8xf32> -> vector<8x4x8xf32>
    %37 = vector.shape_cast %36 : vector<8x4x8xf32> to vector<8x32xf32>
    %c0_21 = arith.constant 0 : index
    %c0_22 = arith.constant 0 : index
    %38 = vector.load %arg10[%c0_21, %c0_22] : memref<32x32xf32, #tpu.memory_space<vmem>>, vector<32x32xf32>
    %cst_23 = arith.constant dense<0.000000e+00> : vector<8x32xf32>
    %39 = tpu.matmul %37, %38, %cst_23 {dimension_numbers = #tpu.dot_dimension_numbers<[1], [1], [0], [0], [0, 0, 1, 0], [], []>} : vector<8x32xf32>, vector<32x32xf32>, vector<8x32xf32> -> vector<8x32xf32>
    %c0_24 = arith.constant 0 : index
    %c0_25 = arith.constant 0 : index
    %40 = vector.load %arg11[%c0_24, %c0_25] : memref<1x32xf32, #tpu.memory_space<vmem>>, vector<1x32xf32>
    %41 = vector.broadcast %40 : vector<1x32xf32> to vector<8x32xf32>
    %42 = arith.addf %39, %41 : vector<8x32xf32>
    %43 = arith.addf %42, %7 : vector<8x32xf32>
    %cst_26 = arith.constant dense<0.000000e+00> : vector<8xf32>
    %44 = vector.multi_reduction <add>, %43, %cst_26 [1] : vector<8x32xf32> to vector<8xf32>
    %45 = vector.shape_cast %44 : vector<8xf32> to vector<8x1xf32>
    %cst_27 = arith.constant 3.200000e+01 : f32
    %46 = vector.broadcast %cst_27 : f32 to vector<8x1xf32>
    %47 = arith.divf %45, %46 : vector<8x1xf32>
    %48 = vector.broadcast %47 : vector<8x1xf32> to vector<8x32xf32>
    %49 = arith.subf %43, %48 : vector<8x32xf32>
    %50 = arith.mulf %49, %49 : vector<8x32xf32>
    %cst_28 = arith.constant dense<0.000000e+00> : vector<8xf32>
    %51 = vector.multi_reduction <add>, %50, %cst_28 [1] : vector<8x32xf32> to vector<8xf32>
    %52 = vector.shape_cast %51 : vector<8xf32> to vector<8x1xf32>
    %cst_29 = arith.constant 3.200000e+01 : f32
    %53 = vector.broadcast %cst_29 : f32 to vector<8x1xf32>
    %54 = arith.divf %52, %53 : vector<8x1xf32>
    %55 = vector.broadcast %47 : vector<8x1xf32> to vector<8x32xf32>
    %56 = arith.subf %43, %55 : vector<8x32xf32>
    %cst_30 = arith.constant 9.99999996E-13 : f32
    %57 = vector.broadcast %cst_30 : f32 to vector<8x1xf32>
    %58 = arith.addf %54, %57 : vector<8x1xf32>
    %59 = math.rsqrt %58 : vector<8x1xf32>
    %60 = vector.broadcast %59 : vector<8x1xf32> to vector<8x32xf32>
    %61 = arith.mulf %56, %60 : vector<8x32xf32>
    %c0_31 = arith.constant 0 : index
    %c0_32 = arith.constant 0 : index
    %62 = vector.load %arg12[%c0_31, %c0_32] : memref<1x32xf32, #tpu.memory_space<vmem>>, vector<1x32xf32>
    %63 = vector.broadcast %62 : vector<1x32xf32> to vector<8x32xf32>
    %64 = arith.mulf %61, %63 : vector<8x32xf32>
    %c0_33 = arith.constant 0 : index
    %c0_34 = arith.constant 0 : index
    %65 = vector.load %arg13[%c0_33, %c0_34] : memref<1x32xf32, #tpu.memory_space<vmem>>, vector<1x32xf32>
    %66 = vector.broadcast %65 : vector<1x32xf32> to vector<8x32xf32>
    %67 = arith.addf %64, %66 : vector<8x32xf32>
    %c0_35 = arith.constant 0 : index
    %c0_36 = arith.constant 0 : index
    %c0_37 = arith.constant 0 : index
    %68 = vector.load %arg14[%c0_35, %c0_36, %c0_37] : memref<1x8x32xf32, #tpu.memory_space<vmem>>, vector<1x8x32xf32>
    %69 = vector.shape_cast %68 : vector<1x8x32xf32> to vector<8x32xf32>
    %70 = vector.shape_cast %67 : vector<8x32xf32> to vector<1x8x32xf32>
    tpu.vector_store %arg14[%c0_35, %c0_36, %c0_37], %70 {strides = array<i32>} : memref<1x8x32xf32, #tpu.memory_space<vmem>>, vector<1x8x32xf32>,
    return
  }
  func.func @transform_0(%arg0: i32, %arg1: i32) -> (i32, i32, i32) {
    %c0_i32 = arith.constant 0 : i32
    %c0_i32_0 = arith.constant 0 : i32
    %c0_i32_1 = arith.constant 0 : i32
    return %arg0, %c0_i32, %c0_i32_0 : i32, i32, i32
  }
  func.func @transform_1(%arg0: i32, %arg1: i32) -> (i32, i32, i32, i32) {
    %c0_i32 = arith.constant 0 : i32
    %c0_i32_0 = arith.constant 0 : i32
    %c0_i32_1 = arith.constant 0 : i32
    %c0_i32_2 = arith.constant 0 : i32
    return %arg0, %c0_i32, %c0_i32_0, %c0_i32_1 : i32, i32, i32, i32
  }
  func.func @transform_2(%arg0: i32, %arg1: i32) -> (i32, i32) {
    %c0_i32 = arith.constant 0 : i32
    %c0_i32_0 = arith.constant 0 : i32
    %c0_i32_1 = arith.constant 0 : i32
    return %c0_i32, %c0_i32_0 : i32, i32
  }
  func.func @transform_3(%arg0: i32, %arg1: i32) -> (i32, i32) {
    %c0_i32 = arith.constant 0 : i32
    %c0_i32_0 = arith.constant 0 : i32
    %c0_i32_1 = arith.constant 0 : i32
    return %c0_i32, %c0_i32_0 : i32, i32
  }
  func.func @transform_4(%arg0: i32, %arg1: i32) -> (i32, i32) {
    %c0_i32 = arith.constant 0 : i32
    %c0_i32_0 = arith.constant 0 : i32
    %c0_i32_1 = arith.constant 0 : i32
    return %c0_i32, %c0_i32_0 : i32, i32
  }
  func.func @transform_5(%arg0: i32, %arg1: i32) -> (i32, i32) {
    %c0_i32 = arith.constant 0 : i32
    %c0_i32_0 = arith.constant 0 : i32
    %c0_i32_1 = arith.constant 0 : i32
    return %c0_i32, %c0_i32_0 : i32, i32
  }
  func.func @transform_6(%arg0: i32, %arg1: i32) -> (i32, i32) {
    %c0_i32 = arith.constant 0 : i32
    %c0_i32_0 = arith.constant 0 : i32
    %c0_i32_1 = arith.constant 0 : i32
    return %c0_i32, %c0_i32_0 : i32, i32
  }
  func.func @transform_7(%arg0: i32, %arg1: i32) -> (i32, i32) {
    %c0_i32 = arith.constant 0 : i32
    %c0_i32_0 = arith.constant 0 : i32
    %c0_i32_1 = arith.constant 0 : i32
    return %c0_i32, %c0_i32_0 : i32, i32
  }
  func.func @transform_8(%arg0: i32, %arg1: i32) -> (i32, i32) {
    %c0_i32 = arith.constant 0 : i32
    %c0_i32_0 = arith.constant 0 : i32
    %c0_i32_1 = arith.constant 0 : i32
    return %c0_i32, %c0_i32_0 : i32, i32
  }
  func.func @transform_9(%arg0: i32, %arg1: i32) -> (i32, i32) {
    %c0_i32 = arith.constant 0 : i32
    %c0_i32_0 = arith.constant 0 : i32
    %c0_i32_1 = arith.constant 0 : i32
    return %c0_i32, %c0_i32_0 : i32, i32
  }
  func.func @transform_10(%arg0: i32, %arg1: i32) -> (i32, i32) {
    %c0_i32 = arith.constant 0 : i32
    %c0_i32_0 = arith.constant 0 : i32
    %c0_i32_1 = arith.constant 0 : i32
    return %c0_i32, %c0_i32_0 : i32, i32
  }
  func.func @transform_11(%arg0: i32, %arg1: i32) -> (i32, i32) {
    %c0_i32 = arith.constant 0 : i32
    %c0_i32_0 = arith.constant 0 : i32
    %c0_i32_1 = arith.constant 0 : i32
    return %c0_i32, %c0_i32_0 : i32, i32
  }
  func.func @transform_12(%arg0: i32, %arg1: i32) -> (i32, i32, i32) {
    %c0_i32 = arith.constant 0 : i32
    %c0_i32_0 = arith.constant 0 : i32
    return %arg0, %arg1, %c0_i32 : i32, i32, i32
  }
}

</mosaic_0001>

<llo_original>
// kernel: tpu_custom_call.1
$region0: #{tpu_custom_call.1}
  #allocation0 [shape = 'u32[]', space=smem, size = 0x4, offset = 0x4, fixed_abs, tag = 'smem constant byte address 0x4 - core index']
  #allocation1 [shape = 'u32[72,128]{1,0:T(1,128)}', space=vmem, size = 0x9000, scoped, tag = 'internal scratch']
  #allocation2 [shape = 'f32[4,8,8]{2,1,0:T(8,128)}', space=vmem, size = 0x4000, scoped, tag = 'scratch operand']
  #allocation3 [shape = 'f32[4,8,8]{2,1,0:T(8,128)}', space=vmem, size = 0x4000, scoped, tag = 'scratch operand']
  %s0 = inlined_call_operand.hbm [shape: f32[2,8,32], index: 0, kind: input, shape index: {}]
  %s1 = inlined_call_operand.hbm [shape: f32[2,1,1,8], index: 1, kind: input, shape index: {}]
  %s2 = inlined_call_operand.hbm [shape: f32[32,32], index: 2, kind: input, shape index: {}]
  %s3 = inlined_call_operand.vmem [shape: f32[1,32], index: 3, kind: input, shape index: {}]
  %s4 = inlined_call_operand.hbm [shape: f32[32,32], index: 4, kind: input, shape index: {}]
  %s5 = inlined_call_operand.vmem [shape: f32[1,32], index: 5, kind: input, shape index: {}]
  %s6 = inlined_call_operand.hbm [shape: f32[32,32], index: 6, kind: input, shape index: {}]
  %s7 = inlined_call_operand.vmem [shape: f32[1,32], index: 7, kind: input, shape index: {}]
  %s8 = inlined_call_operand.hbm [shape: f32[32,32], index: 8, kind: input, shape index: {}]
  %s9 = inlined_call_operand.vmem [shape: f32[1,32], index: 9, kind: input, shape index: {}]
  %s10 = inlined_call_operand.vmem [shape: f32[1,32], index: 10, kind: input, shape index: {}]
  %s11 = inlined_call_operand.vmem [shape: f32[1,32], index: 11, kind: input, shape index: {}]
  %s12 = inlined_call_operand.hbm [shape: f32[2,8,32], index: 12, kind: output, shape index: {}]
  %s13 = sld [smem:[#allocation0]]
  $region109: #{tpu_custom_call.1} parent=0
    _
  %s15 = ssub.s32 1, %s13
  %s16 = scalar_select 0, %s15, %s13
  $region1: #{tpu_custom_call.1} parent=0
    #allocation4 [shape = 'u8[8192]{0}', space=vmem, size = 0x2000, scoped, tag = 'input window, operand 0']
    #allocation5 [shape = 's32[2]{0}', space=sflag, size = 0x8, scoped, tag = 'scoped memory for tpu_custom_call.1']
    #allocation6 [shape = 's32[2]{0}', space=sflag, size = 0x8, scoped, tag = 'scoped memory for tpu_custom_call.1']
    #allocation7 [shape = 'u8[1024]{0}', space=vmem, size = 0x400, scoped, tag = 'input window, operand 1']
    #allocation8 [shape = 's32[2]{0}', space=sflag, size = 0x8, scoped, tag = 'scoped memory for tpu_custom_call.1']
    #allocation9 [shape = 'u8[16384]{0}', space=vmem, size = 0x4000, scoped, tag = 'input window, operand 2, single buffered']
    #allocation10 [shape = 'u8[16384]{0}', space=vmem, size = 0x4000, scoped, tag = 'input window, operand 4, single buffered']
    #allocation11 [shape = 's32[1]{0}', space=sflag, size = 0x4, scoped, tag = 'scoped memory for tpu_custom_call.1']
    #allocation12 [shape = 'u8[16384]{0}', space=vmem, size = 0x4000, scoped, tag = 'input window, operand 6, single buffered']
    #allocation13 [shape = 'u8[16384]{0}', space=vmem, size = 0x4000, scoped, tag = 'input window, operand 8, single buffered']
    #allocation14 [shape = 's32[1]{0}', space=sflag, size = 0x4, scoped, tag = 'scoped memory for tpu_custom_call.1']
    #allocation15 [shape = 'u8[8192]{0}', space=vmem, size = 0x2000, scoped, tag = 'output window, operand 0']
    %17 = vsyncpa [#allocation5], 0
    %s18 = scalar_lea.sflag [#allocation5], 1
    %19 = vsyncpa %s18, 0
    %20 = vsyncpa [#allocation8], 0
    %s21 = scalar_lea.sflag [#allocation8], 1
    %22 = vsyncpa %s21, 0
    %23 = vsyncpa [#allocation11], 0
    %24 = vsyncpa [#allocation14], 0
    %25 = vsyncpa [#allocation6], 0
    %s26 = scalar_lea.sflag [#allocation6], 1
    %27 = vsyncpa %s26, 0
    loop: start=0, step=1, limit=4
    $region2: #{tpu_custom_call.1} parent=1 // loop_pre_header
      _
    $region3: #{tpu_custom_call.1} parent=1 // loop_header
      %s29 = sphi 0, %s33
      %p30 = scmp.ge.s32.totalorder %s29, 4
      %s36 = sphi 0, %s48
      %s37 = sphi 0, %s44
      %s38 = sphi 0, %s36
      %s39 = sphi 0, %s37
      %s40 = sphi 0, %s38
      %s41 = sphi 0, %s39
      %s51 = sphi 0, %s53
      %s54 = sphi 0, %s51
      %s55 = sphi 0, %s54
      %s71 = sphi 0, %s55
      %s77 = sphi 0, %s79
      %s80 = sphi 0, %s77
      %s81 = sphi 0, %s80
      %s97 = sphi 0, %s81
      %s101 = sphi 0, %s101
      %s103 = sphi 0, %s101
      %s104 = sphi 0, %s103
      %s118 = sphi 0, %s104
      %s122 = sphi 0, %s122
      %s124 = sphi 0, %s122
      %s125 = sphi 0, %s124
      %s139 = sphi 0, %s125
      %s143 = sphi 0, %s143
      %s145 = sphi 0, %s143
      %s146 = sphi 0, %s145
      %s160 = sphi 0, %s146
      %s164 = sphi 0, %s164
      %s166 = sphi 0, %s164
      %s167 = sphi 0, %s166
      %s181 = sphi 0, %s167
      %s185 = sphi 0, %s185
      %s187 = sphi 0, %s185
      %s188 = sphi 0, %s187
      %s202 = sphi 0, %s188
      %s206 = sphi 0, %s206
      %s208 = sphi 0, %s206
      %s209 = sphi 0, %s208
      %s223 = sphi 0, %s209
      %s227 = sphi 0, %s227
      %s229 = sphi 0, %s227
      %s230 = sphi 0, %s229
      %s244 = sphi 0, %s230
      %s248 = sphi 0, %s248
      %s250 = sphi 0, %s248
      %s251 = sphi 0, %s250
      %s265 = sphi 0, %s251
      %s269 = sphi 0, %s269
      %s271 = sphi 0, %s269
      %s272 = sphi 0, %s271
      %s286 = sphi 0, %s272
      %s290 = sphi 0, %s290
      %s292 = sphi 0, %s290
      %s293 = sphi 0, %s292
      %s307 = sphi 0, %s293
      %s315 = sphi 0, %s317
      %s318 = sphi 0, %s315
      %s319 = sphi 0, %s318
      %s335 = sphi 0, %s319
    $region4: #{tpu_custom_call.1} parent=1 // loop_header_branch
      %32 = sbr.rel (%p30) target = $region8
    $region5: #{tpu_custom_call.1} parent=1 // loop_body
      %s34 = ssub.s32 %s29, 1
      %s35 = ssub.s32 %s29, 2
      %s42 = sadd.s32 1, %s37
      %p43 = scmp.ge.s32.totalorder %s42, 1
      %s44 = scalar_select %p43, 0, %s42
      %s45 = sadd.s32 1, %s36
      %s46 = scalar_select %p43, %s45, %s36
      %p47 = scmp.ge.s32.totalorder %s46, 2
      %s48 = scalar_select %p47, 0, %s46
      %s49 = ssub.s32 %s36, %s48
      %p50 = scmp.eq.s32.totalorder %s49, 0
      %s52 = sadd.s32 %s51, 1
      %s53 = scalar_select %p50, %s51, %s52
      %p56 = pneg %p50
      %p57 = scmp.eq.s32.totalorder %s29, 1
      %p58 = por %p56, %p57
      %p59 = scmp.ne.s32.totalorder %s51, %s54
      %p60 = scmp.eq.s32.totalorder %s29, 0
      %p61 = por %p59, %p60
      %p62 = scmp.ne.s32.totalorder %s51, %s54
      %p63 = scmp.eq.s32.totalorder %s34, 1
      %p64 = por %p62, %p63
      %p65 = scmp.ne.s32.totalorder %s54, %s55
      %p66 = scmp.eq.s32.totalorder %s34, 0
      %p67 = por %p65, %p66
      %p68 = scmp.ne.s32.totalorder %s54, %s55
      %p69 = scmp.eq.s32.totalorder %s35, 1
      %p70 = por %p68, %p69
      %p72 = scmp.ne.s32.totalorder %s55, %s71
      %p73 = scmp.eq.s32.totalorder %s35, 0
      %p74 = por %p72, %p73
      %s75 = ssub.s32 %s36, %s48
      %p76 = scmp.eq.s32.totalorder %s75, 0
      %s78 = sadd.s32 %s77, 1
      %s79 = scalar_select %p76, %s77, %s78
      %p82 = pneg %p76
      %p83 = scmp.eq.s32.totalorder %s29, 1
      %p84 = por %p82, %p83
      %p85 = scmp.ne.s32.totalorder %s77, %s80
      %p86 = scmp.eq.s32.totalorder %s29, 0
      %p87 = por %p85, %p86
      %p88 = scmp.ne.s32.totalorder %s77, %s80
      %p89 = scmp.eq.s32.totalorder %s34, 1
      %p90 = por %p88, %p89
      %p91 = scmp.ne.s32.totalorder %s80, %s81
      %p92 = scmp.eq.s32.totalorder %s34, 0
      %p93 = por %p91, %p92
      %p94 = scmp.ne.s32.totalorder %s80, %s81
      %p95 = scmp.eq.s32.totalorder %s35, 1
      %p96 = por %p94, %p95
      %p98 = scmp.ne.s32.totalorder %s81, %s97
      %p99 = scmp.eq.s32.totalorder %s35, 0
      %p100 = por %p98, %p99
      %s102 = sadd.s32 %s101, 1
      %p105 = scmp.eq.s32.totalorder %s29, 1
      %p106 = scmp.ne.s32.totalorder %s101, %s103
      %p107 = scmp.eq.s32.totalorder %s29, 0
      %p108 = por %p106, %p107
      %p109 = scmp.ne.s32.totalorder %s101, %s103
      %p110 = scmp.eq.s32.totalorder %s34, 1
      %p111 = por %p109, %p110
      %p112 = scmp.ne.s32.totalorder %s103, %s104
      %p113 = scmp.eq.s32.totalorder %s34, 0
      %p114 = por %p112, %p113
      %p115 = scmp.ne.s32.totalorder %s103, %s104
      %p116 = scmp.eq.s32.totalorder %s35, 1
      %p117 = por %p115, %p116
      %p119 = scmp.ne.s32.totalorder %s104, %s118
      %p120 = scmp.eq.s32.totalorder %s35, 0
      %p121 = por %p119, %p120
      %s123 = sadd.s32 %s122, 1
      %p126 = scmp.eq.s32.totalorder %s29, 1
      %p127 = scmp.ne.s32.totalorder %s122, %s124
      %p128 = scmp.eq.s32.totalorder %s29, 0
      %p129 = por %p127, %p128
      %p130 = scmp.ne.s32.totalorder %s122, %s124
      %p131 = scmp.eq.s32.totalorder %s34, 1
      %p132 = por %p130, %p131
      %p133 = scmp.ne.s32.totalorder %s124, %s125
      %p134 = scmp.eq.s32.totalorder %s34, 0
      %p135 = por %p133, %p134
      %p136 = scmp.ne.s32.totalorder %s124, %s125
      %p137 = scmp.eq.s32.totalorder %s35, 1
      %p138 = por %p136, %p137
      %p140 = scmp.ne.s32.totalorder %s125, %s139
      %p141 = scmp.eq.s32.totalorder %s35, 0
      %p142 = por %p140, %p141
      %s144 = sadd.s32 %s143, 1
      %p147 = scmp.eq.s32.totalorder %s29, 1
      %p148 = scmp.ne.s32.totalorder %s143, %s145
      %p149 = scmp.eq.s32.totalorder %s29, 0
      %p150 = por %p148, %p149
      %p151 = scmp.ne.s32.totalorder %s143, %s145
      %p152 = scmp.eq.s32.totalorder %s34, 1
      %p153 = por %p151, %p152
      %p154 = scmp.ne.s32.totalorder %s145, %s146
      %p155 = scmp.eq.s32.totalorder %s34, 0
      %p156 = por %p154, %p155
      %p157 = scmp.ne.s32.totalorder %s145, %s146
      %p158 = scmp.eq.s32.totalorder %s35, 1
      %p159 = por %p157, %p158
      %p161 = scmp.ne.s32.totalorder %s146, %s160
      %p162 = scmp.eq.s32.totalorder %s35, 0
      %p163 = por %p161, %p162
      %s165 = sadd.s32 %s164, 1
      %p168 = scmp.eq.s32.totalorder %s29, 1
      %p169 = scmp.ne.s32.totalorder %s164, %s166
      %p170 = scmp.eq.s32.totalorder %s29, 0
      %p171 = por %p169, %p170
      %p172 = scmp.ne.s32.totalorder %s164, %s166
      %p173 = scmp.eq.s32.totalorder %s34, 1
      %p174 = por %p172, %p173
      %p175 = scmp.ne.s32.totalorder %s166, %s167
      %p176 = scmp.eq.s32.totalorder %s34, 0
      %p177 = por %p175, %p176
      %p178 = scmp.ne.s32.totalorder %s166, %s167
      %p179 = scmp.eq.s32.totalorder %s35, 1
      %p180 = por %p178, %p179
      %p182 = scmp.ne.s32.totalorder %s167, %s181
      %p183 = scmp.eq.s32.totalorder %s35, 0
      %p184 = por %p182, %p183
      %s186 = sadd.s32 %s185, 1
      %p189 = scmp.eq.s32.totalorder %s29, 1
      %p190 = scmp.ne.s32.totalorder %s185, %s187
      %p191 = scmp.eq.s32.totalorder %s29, 0
      %p192 = por %p190, %p191
      %p193 = scmp.ne.s32.totalorder %s185, %s187
      %p194 = scmp.eq.s32.totalorder %s34, 1
      %p195 = por %p193, %p194
      %p196 = scmp.ne.s32.totalorder %s187, %s188
      %p197 = scmp.eq.s32.totalorder %s34, 0
      %p198 = por %p196, %p197
      %p199 = scmp.ne.s32.totalorder %s187, %s188
      %p200 = scmp.eq.s32.totalorder %s35, 1
      %p201 = por %p199, %p200
      %p203 = scmp.ne.s32.totalorder %s188, %s202
      %p204 = scmp.eq.s32.totalorder %s35, 0
      %p205 = por %p203, %p204
      %s207 = sadd.s32 %s206, 1
      %p210 = scmp.eq.s32.totalorder %s29, 1
      %p211 = scmp.ne.s32.totalorder %s206, %s208
      %p212 = scmp.eq.s32.totalorder %s29, 0
      %p213 = por %p211, %p212
      %p214 = scmp.ne.s32.totalorder %s206, %s208
      %p215 = scmp.eq.s32.totalorder %s34, 1
      %p216 = por %p214, %p215
      %p217 = scmp.ne.s32.totalorder %s208, %s209
      %p218 = scmp.eq.s32.totalorder %s34, 0
      %p219 = por %p217, %p218
      %p220 = scmp.ne.s32.totalorder %s208, %s209
      %p221 = scmp.eq.s32.totalorder %s35, 1
      %p222 = por %p220, %p221
      %p224 = scmp.ne.s32.totalorder %s209, %s223
      %p225 = scmp.eq.s32.totalorder %s35, 0
      %p226 = por %p224, %p225
      %s228 = sadd.s32 %s227, 1
      %p231 = scmp.eq.s32.totalorder %s29, 1
      %p232 = scmp.ne.s32.totalorder %s227, %s229
      %p233 = scmp.eq.s32.totalorder %s29, 0
      %p234 = por %p232, %p233
      %p235 = scmp.ne.s32.totalorder %s227, %s229
      %p236 = scmp.eq.s32.totalorder %s34, 1
      %p237 = por %p235, %p236
      %p238 = scmp.ne.s32.totalorder %s229, %s230
      %p239 = scmp.eq.s32.totalorder %s34, 0
      %p240 = por %p238, %p239
      %p241 = scmp.ne.s32.totalorder %s229, %s230
      %p242 = scmp.eq.s32.totalorder %s35, 1
      %p243 = por %p241, %p242
      %p245 = scmp.ne.s32.totalorder %s230, %s244
      %p246 = scmp.eq.s32.totalorder %s35, 0
      %p247 = por %p245, %p246
      %s249 = sadd.s32 %s248, 1
      %p252 = scmp.eq.s32.totalorder %s29, 1
      %p253 = scmp.ne.s32.totalorder %s248, %s250
      %p254 = scmp.eq.s32.totalorder %s29, 0
      %p255 = por %p253, %p254
      %p256 = scmp.ne.s32.totalorder %s248, %s250
      %p257 = scmp.eq.s32.totalorder %s34, 1
      %p258 = por %p256, %p257
      %p259 = scmp.ne.s32.totalorder %s250, %s251
      %p260 = scmp.eq.s32.totalorder %s34, 0
      %p261 = por %p259, %p260
      %p262 = scmp.ne.s32.totalorder %s250, %s251
      %p263 = scmp.eq.s32.totalorder %s35, 1
      %p264 = por %p262, %p263
      %p266 = scmp.ne.s32.totalorder %s251, %s265
      %p267 = scmp.eq.s32.totalorder %s35, 0
      %p268 = por %p266, %p267
      %s270 = sadd.s32 %s269, 1
      %p273 = scmp.eq.s32.totalorder %s29, 1
      %p274 = scmp.ne.s32.totalorder %s269, %s271
      %p275 = scmp.eq.s32.totalorder %s29, 0
      %p276 = por %p274, %p275
      %p277 = scmp.ne.s32.totalorder %s269, %s271
      %p278 = scmp.eq.s32.totalorder %s34, 1
      %p279 = por %p277, %p278
      %p280 = scmp.ne.s32.totalorder %s271, %s272
      %p281 = scmp.eq.s32.totalorder %s34, 0
      %p282 = por %p280, %p281
      %p283 = scmp.ne.s32.totalorder %s271, %s272
      %p284 = scmp.eq.s32.totalorder %s35, 1
      %p285 = por %p283, %p284
      %p287 = scmp.ne.s32.totalorder %s272, %s286
      %p288 = scmp.eq.s32.totalorder %s35, 0
      %p289 = por %p287, %p288
      %s291 = sadd.s32 %s290, 1
      %p294 = scmp.eq.s32.totalorder %s29, 1
      %p295 = scmp.ne.s32.totalorder %s290, %s292
      %p296 = scmp.eq.s32.totalorder %s29, 0
      %p297 = por %p295, %p296
      %p298 = scmp.ne.s32.totalorder %s290, %s292
      %p299 = scmp.eq.s32.totalorder %s34, 1
      %p300 = por %p298, %p299
      %p301 = scmp.ne.s32.totalorder %s292, %s293
      %p302 = scmp.eq.s32.totalorder %s34, 0
      %p303 = por %p301, %p302
      %p304 = scmp.ne.s32.totalorder %s292, %s293
      %p305 = scmp.eq.s32.totalorder %s35, 1
      %p306 = por %p304, %p305
      %p308 = scmp.ne.s32.totalorder %s293, %s307
      %p309 = scmp.eq.s32.totalorder %s35, 0
      %p310 = por %p308, %p309
      %s311 = ssub.s32 %s36, %s48
      %s312 = ssub.s32 %s37, %s44
      %s313 = sor.u32 %s311, %s312
      %p314 = scmp.eq.s32.totalorder %s313, 0
      %s316 = sadd.s32 %s315, 1
      %s317 = scalar_select %p314, %s315, %s316
      %p320 = pneg %p314
      %p321 = scmp.eq.s32.totalorder %s29, 1
      %p322 = por %p320, %p321
      %p323 = scmp.ne.s32.totalorder %s315, %s318
      %p324 = scmp.eq.s32.totalorder %s29, 0
      %p325 = por %p323, %p324
      %p326 = scmp.ne.s32.totalorder %s315, %s318
      %p327 = scmp.eq.s32.totalorder %s34, 1
      %p328 = por %p326, %p327
      %p329 = scmp.ne.s32.totalorder %s318, %s319
      %p330 = scmp.eq.s32.totalorder %s34, 0
      %p331 = por %p329, %p330
      %p332 = scmp.ne.s32.totalorder %s318, %s319
      %p333 = scmp.eq.s32.totalorder %s35, 1
      %p334 = por %p332, %p333
      %p336 = scmp.ne.s32.totalorder %s319, %s335
      %p337 = scmp.eq.s32.totalorder %s35, 0
      %p338 = por %p336, %p337
      %p339 = scmp.le.s32.totalorder 1, %s29
      %p340 = scmp.lt.s32.totalorder %s29, 3
      %p341 = pnand %p339, %p340
      %p342 = pneg %p341
      // Predicated region
      $region9: #{tpu_custom_call.1} parent=5 // pred_check
        _
      $region10: #{tpu_custom_call.1} parent=5 // pred_check_branch
        %344 = sbr.rel (%p341) target = $region12
      $region11: #{tpu_custom_call.1} parent=5 // pred_region
        %s345 = ssub.s32 %s29, 1
        // Predicated region
        $region13: #{tpu_custom_call.1} parent=11 // pred_check
          %p346 = pneg %p114
        $region14: #{tpu_custom_call.1} parent=11 // pred_check_branch
          %348 = sbr.rel (%p346) target = $region16
        $region15: #{tpu_custom_call.1} parent=11 // pred_region
          %350 = vsyncadd [#allocation8], 0
          %s351 = sshll.u32 %s2, 4
          %s352 = int_to_ptr.hbm [resolvable:$true] %s351
          %s353 = sshll.u32 [#allocation9], 4
          %s354 = int_to_ptr.vmem [resolvable:$true] %s353
          %359 = dma.hbm_to_vmem [thread:$0]  %s352, 512, %s354, [#allocation8], 128, 128, 8
        $region16: #{tpu_custom_call.1} parent=11 // pred_fallthru
          _
        // Predicated region
        $region17: #{tpu_custom_call.1} parent=11 // pred_check
          %p360 = pneg %p135
        $region18: #{tpu_custom_call.1} parent=11 // pred_check_branch
          %362 = sbr.rel (%p360) target = $region20
        $region19: #{tpu_custom_call.1} parent=11 // pred_region
          _
        $region20: #{tpu_custom_call.1} parent=11 // pred_fallthru
          _
        // Predicated region
        $region21: #{tpu_custom_call.1} parent=11 // pred_check
          %p363 = pneg %p156
        $region22: #{tpu_custom_call.1} parent=11 // pred_check_branch
          %365 = sbr.rel (%p363) target = $region24
        $region23: #{tpu_custom_call.1} parent=11 // pred_region
          %367 = vsyncadd [#allocation11], 0
          %s368 = sshll.u32 %s4, 4
          %s369 = int_to_ptr.hbm [resolvable:$true] %s368
          %s370 = sshll.u32 [#allocation10], 4
          %s371 = int_to_ptr.vmem [resolvable:$true] %s370
          %376 = dma.hbm_to_vmem [thread:$0]  %s369, 512, %s371, [#allocation11], 128, 128, 8
        $region24: #{tpu_custom_call.1} parent=11 // pred_fallthru
          _
        // Predicated region
        $region25: #{tpu_custom_call.1} parent=11 // pred_check
          %p377 = pneg %p177
        $region26: #{tpu_custom_call.1} parent=11 // pred_check_branch
          %379 = sbr.rel (%p377) target = $region28
        $region27: #{tpu_custom_call.1} parent=11 // pred_region
          _
        $region28: #{tpu_custom_call.1} parent=11 // pred_fallthru
          _
        // Predicated region
        $region29: #{tpu_custom_call.1} parent=11 // pred_check
          %p380 = pneg %p198
        $region30: #{tpu_custom_call.1} parent=11 // pred_check_branch
          %382 = sbr.rel (%p380) target = $region32
        $region31: #{tpu_custom_call.1} parent=11 // pred_region
          %384 = vsyncadd [#allocation11], 0
          %s385 = sshll.u32 %s6, 4
          %s386 = int_to_ptr.hbm [resolvable:$true] %s385
          %s387 = sshll.u32 [#allocation12], 4
          %s388 = int_to_ptr.vmem [resolvable:$true] %s387
          %393 = dma.hbm_to_vmem [thread:$0]  %s386, 512, %s388, [#allocation11], 128, 128, 8
        $region32: #{tpu_custom_call.1} parent=11 // pred_fallthru
          _
        // Predicated region
        $region33: #{tpu_custom_call.1} parent=11 // pred_check
          %p394 = pneg %p219
        $region34: #{tpu_custom_call.1} parent=11 // pred_check_branch
          %396 = sbr.rel (%p394) target = $region36
        $region35: #{tpu_custom_call.1} parent=11 // pred_region
          _
        $region36: #{tpu_custom_call.1} parent=11 // pred_fallthru
          _
        // Predicated region
        $region37: #{tpu_custom_call.1} parent=11 // pred_check
          %p397 = pneg %p240
        $region38: #{tpu_custom_call.1} parent=11 // pred_check_branch
          %399 = sbr.rel (%p397) target = $region40
        $region39: #{tpu_custom_call.1} parent=11 // pred_region
          %401 = vsyncadd [#allocation14], 0
          %s402 = sshll.u32 %s8, 4
          %s403 = int_to_ptr.hbm [resolvable:$true] %s402
          %s404 = sshll.u32 [#allocation13], 4
          %s405 = int_to_ptr.vmem [resolvable:$true] %s404
          %410 = dma.hbm_to_vmem [thread:$0]  %s403, 512, %s405, [#allocation14], 128, 128, 8
        $region40: #{tpu_custom_call.1} parent=11 // pred_fallthru
          _
        // Predicated region
        $region41: #{tpu_custom_call.1} parent=11 // pred_check
          %p411 = pneg %p261
        $region42: #{tpu_custom_call.1} parent=11 // pred_check_branch
          %413 = sbr.rel (%p411) target = $region44
        $region43: #{tpu_custom_call.1} parent=11 // pred_region
          _
        $region44: #{tpu_custom_call.1} parent=11 // pred_fallthru
          _
        // Predicated region
        $region45: #{tpu_custom_call.1} parent=11 // pred_check
          %p414 = pneg %p282
        $region46: #{tpu_custom_call.1} parent=11 // pred_check_branch
          %416 = sbr.rel (%p414) target = $region48
        $region47: #{tpu_custom_call.1} parent=11 // pred_region
          _
        $region48: #{tpu_custom_call.1} parent=11 // pred_fallthru
          _
        // Predicated region
        $region49: #{tpu_custom_call.1} parent=11 // pred_check
          %p417 = pneg %p303
        $region50: #{tpu_custom_call.1} parent=11 // pred_check_branch
          %419 = sbr.rel (%p417) target = $region52
        $region51: #{tpu_custom_call.1} parent=11 // pred_region
          _
        $region52: #{tpu_custom_call.1} parent=11 // pred_fallthru
          _
      $region12: #{tpu_custom_call.1} parent=5 // pred_fallthru
        _
      %p420 = scmp.lt.s32.totalorder %s29, 2
      // Predicated region
      $region53: #{tpu_custom_call.1} parent=5 // pred_check
        %p421 = pneg %p420
      $region54: #{tpu_custom_call.1} parent=5 // pred_check_branch
        %423 = sbr.rel (%p421) target = $region56
      $region55: #{tpu_custom_call.1} parent=5 // pred_region
        // Predicated region
        $region57: #{tpu_custom_call.1} parent=55 // pred_check
          %p424 = pneg %p61
        $region58: #{tpu_custom_call.1} parent=55 // pred_check_branch
          %426 = sbr.rel (%p424) target = $region60
        $region59: #{tpu_custom_call.1} parent=55 // pred_region
          %s427 = sand.u32 %s51, 1
          %s428 = scalar_lea.sflag [#allocation5], %s427
          %s429 = sand.u32 %s51, 1
          %s430 = smul.addr %s429, 8
          %s431 = scalar_lea.vmem [#allocation4], %s430
          %433 = vsyncadd %s428, 0
          %s434 = smul.addr %s36, 8
          %s435 = scalar_lea.hbm %s0, %s434
          %s437 = sshll.u32 %s435, 4
          %s438 = int_to_ptr.hbm [resolvable:$true] %s437
          %s439 = sshll.u32 %s431, 4
          %s440 = int_to_ptr.vmem [resolvable:$true] %s439
          %442 = dma.hbm_to_vmem [thread:$0]  %s438, 128, %s440, %s428
        $region60: #{tpu_custom_call.1} parent=55 // pred_fallthru
          _
        // Predicated region
        $region61: #{tpu_custom_call.1} parent=55 // pred_check
          %p443 = pneg %p87
        $region62: #{tpu_custom_call.1} parent=55 // pred_check_branch
          %445 = sbr.rel (%p443) target = $region64
        $region63: #{tpu_custom_call.1} parent=55 // pred_region
          %s446 = sand.u32 %s29, 1
          %s447 = scalar_lea.sflag [#allocation8], %s446
          %s448 = sand.u32 %s77, 1
          %s449 = scalar_lea.vmem [#allocation7], %s448
          %451 = vsyncadd %s447, 0
          %s452 = scalar_lea.hbm %s1, %s36
          %s454 = sshll.u32 %s452, 4
          %s455 = int_to_ptr.hbm [resolvable:$true] %s454
          %s456 = sshll.u32 %s449, 4
          %s457 = int_to_ptr.vmem [resolvable:$true] %s456
          %459 = dma.hbm_to_vmem [thread:$0]  %s455, 16, %s457, %s447
        $region64: #{tpu_custom_call.1} parent=55 // pred_fallthru
          _
      $region56: #{tpu_custom_call.1} parent=5 // pred_fallthru
        _
      %p460 = scmp.le.s32.totalorder 1, %s29
      %p461 = scmp.lt.s32.totalorder %s29, 3
      %p462 = pnand %p460, %p461
      %p463 = pneg %p462
      // Predicated region
      $region65: #{tpu_custom_call.1} parent=5 // pred_check
        _
      $region66: #{tpu_custom_call.1} parent=5 // pred_check_branch
        %465 = sbr.rel (%p462) target = $region68
      $region67: #{tpu_custom_call.1} parent=5 // pred_region
        %s466 = ssub.s32 %s29, 1
        %s467 = sand.u32 %s54, 1
        %s468 = scalar_lea.sflag [#allocation5], %s467
        %s469 = sand.u32 %s54, 1
        %s470 = smul.addr %s469, 8
        %s471 = scalar_lea.vmem [#allocation4], %s470
        // Predicated region
        $region69: #{tpu_custom_call.1} parent=67 // pred_check
          %p472 = pneg %p67
        $region70: #{tpu_custom_call.1} parent=67 // pred_check_branch
          %474 = sbr.rel (%p472) target = $region72
        $region71: #{tpu_custom_call.1} parent=67 // pred_region
          %476 = dma.done %s468, 128
        $region72: #{tpu_custom_call.1} parent=67 // pred_fallthru
          _
        %s477 = sand.u32 %s34, 1
        %s478 = scalar_lea.sflag [#allocation8], %s477
        %s479 = sand.u32 %s80, 1
        %s480 = scalar_lea.vmem [#allocation7], %s479
        // Predicated region
        $region73: #{tpu_custom_call.1} parent=67 // pred_check
          %p481 = pneg %p93
        $region74: #{tpu_custom_call.1} parent=67 // pred_check_branch
          %483 = sbr.rel (%p481) target = $region76
        $region75: #{tpu_custom_call.1} parent=67 // pred_region
          %485 = dma.done %s478, 16
        $region76: #{tpu_custom_call.1} parent=67 // pred_fallthru
          _
        // Predicated region
        $region77: #{tpu_custom_call.1} parent=67 // pred_check
          %p486 = pneg %p114
        $region78: #{tpu_custom_call.1} parent=67 // pred_check_branch
          %488 = sbr.rel (%p486) target = $region80
        $region79: #{tpu_custom_call.1} parent=67 // pred_region
          %490 = dma.done [#allocation8], 512
        $region80: #{tpu_custom_call.1} parent=67 // pred_fallthru
          _
        // Predicated region
        $region81: #{tpu_custom_call.1} parent=67 // pred_check
          %p491 = pneg %p156
        $region82: #{tpu_custom_call.1} parent=67 // pred_check_branch
          %493 = sbr.rel (%p491) target = $region84
        $region83: #{tpu_custom_call.1} parent=67 // pred_region
          %495 = dma.done [#allocation11], 512
        $region84: #{tpu_custom_call.1} parent=67 // pred_fallthru
          _
        // Predicated region
        $region85: #{tpu_custom_call.1} parent=67 // pred_check
          %p496 = pneg %p198
        $region86: #{tpu_custom_call.1} parent=67 // pred_check_branch
          %498 = sbr.rel (%p496) target = $region88
        $region87: #{tpu_custom_call.1} parent=67 // pred_region
          %500 = dma.done [#allocation11], 512
        $region88: #{tpu_custom_call.1} parent=67 // pred_fallthru
          _
        // Predicated region
        $region89: #{tpu_custom_call.1} parent=67 // pred_check
          %p501 = pneg %p240
        $region90: #{tpu_custom_call.1} parent=67 // pred_check_branch
          %503 = sbr.rel (%p501) target = $region92
        $region91: #{tpu_custom_call.1} parent=67 // pred_region
          %505 = dma.done [#allocation14], 512
        $region92: #{tpu_custom_call.1} parent=67 // pred_fallthru
          _
        %s506 = sand.u32 %s54, 1
        %s507 = scalar_lea.sflag [#allocation5], %s506
        %s508 = sand.u32 %s54, 1
        %s509 = smul.addr %s508, 8
        %s510 = scalar_lea.vmem [#allocation4], %s509
        %p511 = pneg %p67
        %p512 = pneg %p64
        %s513 = sand.u32 %s34, 1
        %s514 = scalar_lea.sflag [#allocation8], %s513
        %s515 = sand.u32 %s80, 1
        %s516 = scalar_lea.vmem [#allocation7], %s515
        %p517 = pneg %p93
        %p518 = pneg %p90
        %p519 = pneg %p114
        %p520 = pneg %p111
        %p521 = pneg %p135
        %p522 = pneg %p132
        %p523 = pneg %p156
        %p524 = pneg %p153
        %p525 = pneg %p177
        %p526 = pneg %p174
        %p527 = pneg %p198
        %p528 = pneg %p195
        %p529 = pneg %p219
        %p530 = pneg %p216
        %p531 = pneg %p240
        %p532 = pneg %p237
        %p533 = pneg %p261
        %p534 = pneg %p258
        %p535 = pneg %p282
        %p536 = pneg %p279
        %p537 = pneg %p303
        %p538 = pneg %p300
        %p539 = pneg %p331
        %p540 = pneg %p328
        %s541 = sand.u32 %s318, 1
        %s542 = scalar_lea.sflag [#allocation6], %s541
        %s543 = sand.u32 %s318, 1
        %s544 = smul.addr %s543, 8
        %s545 = scalar_lea.vmem [#allocation15], %s544
        %p546 = scmp.eq.s32.totalorder %s39, 0
        // Predicated region
        $region93: #{tpu_custom_call.1} parent=67 // pred_check
          %p547 = pneg %p546
        $region94: #{tpu_custom_call.1} parent=67 // pred_check_branch
          %549 = sbr.rel (%p547) target = $region96
        $region95: #{tpu_custom_call.1} parent=67 // pred_region
          %v550 = vld [vmem:[%s471] sm:$0xff]
          %v551 = vld [vmem:[#allocation10] sm:$0xff]
          %v552 = vld [vmem:[#allocation10 + $0x8] sm:$0xff]
          %v553 = vld [vmem:[#allocation10 + $0x10] sm:$0xff]
          %v554 = vld [vmem:[#allocation10 + $0x18] sm:$0xff]
          %v555 = vld [vmem:[%s5] sm:$0x1]
          %v557 = vperm.slane %v555, 0
          %vm559 = vcmask 261120
          %v561 = vsel %vm559, %v550, 0
          %v564 = vsel %vm559, %v551, 0
          %v567 = vsel %vm559, %v552, 0
          %v570 = vsel %vm559, %v553, 0
          %v573 = vsel %vm559, %v554, 0
          %575 = vmatpush.xpose.msra.mxu0 0.0
          %576 = vmatpush.xpose.msra.mxu0 0.0
          %577 = vmatpush.xpose.msra.mxu0 0.0
          %578 = vmatpush.xpose.msra.mxu0 0.0
          %579 = vmatpush.xpose.msra.mxu0 0.0
          %580 = vmatpush.xpose.msra.mxu0 0.0
          %581 = vmatpush.xpose.msra.mxu0 0.0
          %582 = vmatpush.xpose.msra.mxu0 0.0
          %583 = vmatpush.xpose.msra.mxu0 0.0
          %584 = vmatpush.xpose.msra.mxu0 0.0
          %585 = vmatpush.xpose.msra.mxu0 0.0
          %586 = vmatpush.xpose.msra.mxu0 0.0
          %587 = vmatpush.xpose.msra.mxu0 %v573
          %588 = vmatpush.xpose.msra.mxu0 %v570
          %589 = vmatpush.xpose.msra.mxu0 %v567
          %590 = vmatpush.xpose.msra.mxu0 %v564
          %591 = vmatmul.f32.gmra.mxu0 %v561
          %v592 = vpop.f32.mrf.mxu0
          %v593 = vadd.f32 %v557, %v592
          %594 = vdwg.mxu0
          %v595 = vld [vmem:[#allocation12] sm:$0xff]
          %v596 = vld [vmem:[#allocation12 + $0x8] sm:$0xff]
          %v597 = vld [vmem:[#allocation12 + $0x10] sm:$0xff]
          %v598 = vld [vmem:[#allocation12 + $0x18] sm:$0xff]
          %v599 = vld [vmem:[%s7] sm:$0x1]
          %v601 = vperm.slane %v599, 0
          %v604 = vsel %vm559, %v595, 0
          %v607 = vsel %vm559, %v596, 0
          %v610 = vsel %vm559, %v597, 0
          %v613 = vsel %vm559, %v598, 0
          %615 = vmatpush.xpose.msra.mxu0 0.0
          %616 = vmatpush.xpose.msra.mxu0 0.0
          %617 = vmatpush.xpose.msra.mxu0 0.0
          %618 = vmatpush.xpose.msra.mxu0 0.0
          %619 = vmatpush.xpose.msra.mxu0 0.0
          %620 = vmatpush.xpose.msra.mxu0 0.0
          %621 = vmatpush.xpose.msra.mxu0 0.0
          %622 = vmatpush.xpose.msra.mxu0 0.0
          %623 = vmatpush.xpose.msra.mxu0 0.0
          %624 = vmatpush.xpose.msra.mxu0 0.0
          %625 = vmatpush.xpose.msra.mxu0 0.0
          %626 = vmatpush.xpose.msra.mxu0 0.0
          %627 = vmatpush.xpose.msra.mxu0 %v613
          %628 = vmatpush.xpose.msra.mxu0 %v610
          %629 = vmatpush.xpose.msra.mxu0 %v607
          %630 = vmatpush.xpose.msra.mxu0 %v604
          %631 = vmatmul.f32.gmra.mxu0 %v561
          %v632 = vpop.f32.mrf.mxu0
          %v633 = vadd.f32 %v601, %v632
          %634 = vdwg.mxu0
          %636 = vrot.lane.b32.xlu0 %v593, 120
          %v637 = vpop.permute.xlu0 %636
          %639 = vrot.lane.b32.xlu0 %v593, 112
          %v640 = vpop.permute.xlu0 %639
          %642 = vrot.lane.b32.xlu0 %v593, 104
          %v643 = vpop.permute.xlu0 %642
          %v645 = vrot.slane %v640, 4
          %vm646 = vcmask 1047556
          %v647 = vsel %vm646, %v645, %v593
          %v648 = vrot.slane %v593, 4
          %v649 = vsel %vm646, %v640, %v648
          %v651 = vunpack.c.l.s4 1983009808
          %v652 = vunpack.c.0.s8 %v651
          %v653 = vperm.slane %v647, %v652
          %v655 = vunpack.c.l.s4 1983009808
          %v656 = vunpack.c.0.s8 %v655
          %v657 = vperm.slane %v649, %v656
          %v658 = vrot.slane %v643, 4
          %v659 = vsel %vm646, %v658, %v637
          %v660 = vrot.slane %v637, 4
          %v661 = vsel %vm646, %v643, %v660
          %v663 = vunpack.c.l.s4 1983009808
          %v664 = vunpack.c.0.s8 %v663
          %v665 = vperm.slane %v659, %v664
          %v667 = vunpack.c.l.s4 1983009808
          %v668 = vunpack.c.0.s8 %v667
          %v669 = vperm.slane %v661, %v668
          %v670 = vrot.slane %v665, 4
          %v671 = vsel %vm646, %v670, %v653
          %v672 = vrot.slane %v653, 4
          %v673 = vsel %vm646, %v665, %v672
          %v675 = vunpack.c.l.s4 1934713408
          %v676 = vunpack.c.0.s8 %v675
          %v677 = vperm.slane %v671, %v676
          %v679 = vunpack.c.l.s4 1934713408
          %v680 = vunpack.c.0.s8 %v679
          %v681 = vperm.slane %v673, %v680
          %v682 = vrot.slane %v669, 4
          %v683 = vsel %vm646, %v682, %v657
          %v684 = vrot.slane %v657, 4
          %v685 = vsel %vm646, %v669, %v684
          %v687 = vunpack.c.l.s4 1934713408
          %v688 = vunpack.c.0.s8 %v687
          %v689 = vperm.slane %v683, %v688
          %v691 = vunpack.c.l.s4 1934713408
          %v692 = vunpack.c.0.s8 %v691
          %v693 = vperm.slane %v685, %v692
          %v694 = vrot.slane %v677, 4
          %v695 = vsel %vm646, 0.0, %v694
          %v696 = vrot.slane %v681, 4
          %v697 = vsel %vm646, 0.0, %v696
          %v698 = vrot.slane %v689, 4
          %v699 = vsel %vm646, 0.0, %v698
          %v700 = vrot.slane %v693, 4
          %v701 = vsel %vm646, 0.0, %v700
          %v702 = vsel %vm646, %v696, %v677
          %v704 = vunpack.c.l.s4 1983009808
          %v705 = vunpack.c.0.s8 %v704
          %v706 = vperm.slane %v702, %v705
          %v707 = vrot.slane %v697, 4
          %v708 = vsel %vm646, %v707, %v695
          %v710 = vunpack.c.l.s4 1983009808
          %v711 = vunpack.c.0.s8 %v710
          %v712 = vperm.slane %v708, %v711
          %v713 = vsel %vm646, %v700, %v689
          %v715 = vunpack.c.l.s4 1983009808
          %v716 = vunpack.c.0.s8 %v715
          %v717 = vperm.slane %v713, %v716
          %v718 = vrot.slane %v701, 4
          %v719 = vsel %vm646, %v718, %v699
          %v721 = vunpack.c.l.s4 1983009808
          %v722 = vunpack.c.0.s8 %v721
          %v723 = vperm.slane %v719, %v722
          %v724 = vrot.slane %v712, 4
          %v725 = vsel %vm646, %v724, %v706
          %v726 = vrot.slane %v706, 4
          %v727 = vsel %vm646, %v712, %v726
          %v729 = vunpack.c.l.s4 1934713408
          %v730 = vunpack.c.0.s8 %v729
          %v731 = vperm.slane %v725, %v730
          %v733 = vunpack.c.l.s4 1934713408
          %v734 = vunpack.c.0.s8 %v733
          %v735 = vperm.slane %v727, %v734
          %v736 = vrot.slane %v723, 4
          %v737 = vsel %vm646, %v736, %v717
          %v738 = vrot.slane %v717, 4
          %v739 = vsel %vm646, %v723, %v738
          %v741 = vunpack.c.l.s4 1934713408
          %v742 = vunpack.c.0.s8 %v741
          %v743 = vperm.slane %v737, %v742
          %v745 = vunpack.c.l.s4 1934713408
          %v746 = vunpack.c.0.s8 %v745
          %v747 = vperm.slane %v739, %v746
          %v748 = vrot.slane %v743, 4
          %v749 = vsel %vm646, %v748, %v731
          %v750 = vrot.slane %v731, 4
          %v751 = vsel %vm646, %v743, %v750
          %v752 = vrot.slane %v747, 4
          %v753 = vsel %vm646, %v752, %v735
          %v754 = vrot.slane %v735, 4
          %v755 = vsel %vm646, %v747, %v754
          %vm756 = vcmask 64512
          %757 = vst.msk [vmem:[#allocation2] sm:$0xff] %vm756, %v749
          %758 = vst.msk [vmem:[#allocation2 + $0x8] sm:$0xff] %vm756, %v751
          %759 = vst.msk [vmem:[#allocation2 + $0x10] sm:$0xff] %vm756, %v753
          %760 = vst.msk [vmem:[#allocation2 + $0x18] sm:$0xff] %vm756, %v755
          %762 = vrot.lane.b32.xlu0 %v633, 120
          %v763 = vpop.permute.xlu0 %762
          %765 = vrot.lane.b32.xlu0 %v633, 112
          %v766 = vpop.permute.xlu0 %765
          %768 = vrot.lane.b32.xlu0 %v633, 104
          %v769 = vpop.permute.xlu0 %768
          %v771 = vrot.slane %v766, 4
          %v772 = vsel %vm646, %v771, %v633
          %v773 = vrot.slane %v633, 4
          %v774 = vsel %vm646, %v766, %v773
          %v776 = vunpack.c.l.s4 1983009808
          %v777 = vunpack.c.0.s8 %v776
          %v778 = vperm.slane %v772, %v777
          %v780 = vunpack.c.l.s4 1983009808
          %v781 = vunpack.c.0.s8 %v780
          %v782 = vperm.slane %v774, %v781
          %v783 = vrot.slane %v769, 4
          %v784 = vsel %vm646, %v783, %v763
          %v785 = vrot.slane %v763, 4
          %v786 = vsel %vm646, %v769, %v785
          %v788 = vunpack.c.l.s4 1983009808
          %v789 = vunpack.c.0.s8 %v788
          %v790 = vperm.slane %v784, %v789
          %v792 = vunpack.c.l.s4 1983009808
          %v793 = vunpack.c.0.s8 %v792
          %v794 = vperm.slane %v786, %v793
          %v795 = vrot.slane %v790, 4
          %v796 = vsel %vm646, %v795, %v778
          %v797 = vrot.slane %v778, 4
          %v798 = vsel %vm646, %v790, %v797
          %v800 = vunpack.c.l.s4 1934713408
          %v801 = vunpack.c.0.s8 %v800
          %v802 = vperm.slane %v796, %v801
          %v804 = vunpack.c.l.s4 1934713408
          %v805 = vunpack.c.0.s8 %v804
          %v806 = vperm.slane %v798, %v805
          %v807 = vrot.slane %v794, 4
          %v808 = vsel %vm646, %v807, %v782
          %v809 = vrot.slane %v782, 4
          %v810 = vsel %vm646, %v794, %v809
          %v812 = vunpack.c.l.s4 1934713408
          %v813 = vunpack.c.0.s8 %v812
          %v814 = vperm.slane %v808, %v813
          %v816 = vunpack.c.l.s4 1934713408
          %v817 = vunpack.c.0.s8 %v816
          %v818 = vperm.slane %v810, %v817
          %v819 = vrot.slane %v802, 4
          %v820 = vsel %vm646, 0.0, %v819
          %v821 = vrot.slane %v806, 4
          %v822 = vsel %vm646, 0.0, %v821
          %v823 = vrot.slane %v814, 4
          %v824 = vsel %vm646, 0.0, %v823
          %v825 = vrot.slane %v818, 4
          %v826 = vsel %vm646, 0.0, %v825
          %v827 = vsel %vm646, %v821, %v802
          %v829 = vunpack.c.l.s4 1983009808
          %v830 = vunpack.c.0.s8 %v829
          %v831 = vperm.slane %v827, %v830
          %v832 = vrot.slane %v822, 4
          %v833 = vsel %vm646, %v832, %v820
          %v835 = vunpack.c.l.s4 1983009808
          %v836 = vunpack.c.0.s8 %v835
          %v837 = vperm.slane %v833, %v836
          %v838 = vsel %vm646, %v825, %v814
          %v840 = vunpack.c.l.s4 1983009808
          %v841 = vunpack.c.0.s8 %v840
          %v842 = vperm.slane %v838, %v841
          %v843 = vrot.slane %v826, 4
          %v844 = vsel %vm646, %v843, %v824
          %v846 = vunpack.c.l.s4 1983009808
          %v847 = vunpack.c.0.s8 %v846
          %v848 = vperm.slane %v844, %v847
          %v849 = vrot.slane %v837, 4
          %v850 = vsel %vm646, %v849, %v831
          %v851 = vrot.slane %v831, 4
          %v852 = vsel %vm646, %v837, %v851
          %v854 = vunpack.c.l.s4 1934713408
          %v855 = vunpack.c.0.s8 %v854
          %v856 = vperm.slane %v850, %v855
          %v858 = vunpack.c.l.s4 1934713408
          %v859 = vunpack.c.0.s8 %v858
          %v860 = vperm.slane %v852, %v859
          %v861 = vrot.slane %v848, 4
          %v862 = vsel %vm646, %v861, %v842
          %v863 = vrot.slane %v842, 4
          %v864 = vsel %vm646, %v848, %v863
          %v866 = vunpack.c.l.s4 1934713408
          %v867 = vunpack.c.0.s8 %v866
          %v868 = vperm.slane %v862, %v867
          %v870 = vunpack.c.l.s4 1934713408
          %v871 = vunpack.c.0.s8 %v870
          %v872 = vperm.slane %v864, %v871
          %v873 = vrot.slane %v868, 4
          %v874 = vsel %vm646, %v873, %v856
          %v875 = vrot.slane %v856, 4
          %v876 = vsel %vm646, %v868, %v875
          %v877 = vrot.slane %v872, 4
          %v878 = vsel %vm646, %v877, %v860
          %v879 = vrot.slane %v860, 4
          %v880 = vsel %vm646, %v872, %v879
          %881 = vst.msk [vmem:[#allocation3] sm:$0xff] %vm756, %v874
          %882 = vst.msk [vmem:[#allocation3 + $0x8] sm:$0xff] %vm756, %v876
          %883 = vst.msk [vmem:[#allocation3 + $0x10] sm:$0xff] %vm756, %v878
          %884 = vst.msk [vmem:[#allocation3 + $0x18] sm:$0xff] %vm756, %v880
        $region96: #{tpu_custom_call.1} parent=67 // pred_fallthru
          _
        %s885 = smul.u32 %s39, 8
        %s886 = scalar_lea.vmem %s471, %s885 [#allocation4]
        %v887 = vld [vmem:[%s886] sm:$0xff]
        %v888 = vld [vmem:[#allocation9] sm:$0xff]
        %v889 = vld [vmem:[#allocation9 + $0x8] sm:$0xff]
        %v890 = vld [vmem:[#allocation9 + $0x10] sm:$0xff]
        %v891 = vld [vmem:[#allocation9 + $0x18] sm:$0xff]
        %v892 = vld [vmem:[%s3] sm:$0x1]
        %v894 = vperm.slane %v892, 0
        %vm896 = vcmask 261120
        %v898 = vsel %vm896, %v887, 0
        %v901 = vsel %vm896, %v888, 0
        %v904 = vsel %vm896, %v889, 0
        %v907 = vsel %vm896, %v890, 0
        %v910 = vsel %vm896, %v891, 0
        %912 = vmatpush.xpose.msra.mxu0 0.0
        %913 = vmatpush.xpose.msra.mxu0 0.0
        %914 = vmatpush.xpose.msra.mxu0 0.0
        %915 = vmatpush.xpose.msra.mxu0 0.0
        %916 = vmatpush.xpose.msra.mxu0 0.0
        %917 = vmatpush.xpose.msra.mxu0 0.0
        %918 = vmatpush.xpose.msra.mxu0 0.0
        %919 = vmatpush.xpose.msra.mxu0 0.0
        %920 = vmatpush.xpose.msra.mxu0 0.0
        %921 = vmatpush.xpose.msra.mxu0 0.0
        %922 = vmatpush.xpose.msra.mxu0 0.0
        %923 = vmatpush.xpose.msra.mxu0 0.0
        %924 = vmatpush.xpose.msra.mxu0 %v910
        %925 = vmatpush.xpose.msra.mxu0 %v907
        %926 = vmatpush.xpose.msra.mxu0 %v904
        %927 = vmatpush.xpose.msra.mxu0 %v901
        %928 = vmatmul.f32.gmra.mxu0 %v898
        %v929 = vpop.f32.mrf.mxu0
        %v930 = vadd.f32 %v894, %v929
        %931 = vdwg.mxu0
        %v932 = vmul.f32 %v930, 0.35355338
        %934 = vrot.lane.b32.xlu0 %v932, 120
        %v935 = vpop.permute.xlu0 %934
        %937 = vrot.lane.b32.xlu0 %v932, 112
        %v938 = vpop.permute.xlu0 %937
        %940 = vrot.lane.b32.xlu0 %v932, 104
        %v941 = vpop.permute.xlu0 %940
        %v943 = vrot.slane %v938, 4
        %vm944 = vcmask 1047556
        %v945 = vsel %vm944, %v943, %v932
        %v946 = vrot.slane %v932, 4
        %v947 = vsel %vm944, %v938, %v946
        %v949 = vunpack.c.l.s4 1983009808
        %v950 = vunpack.c.0.s8 %v949
        %v951 = vperm.slane %v945, %v950
        %v953 = vunpack.c.l.s4 1983009808
        %v954 = vunpack.c.0.s8 %v953
        %v955 = vperm.slane %v947, %v954
        %v956 = vrot.slane %v941, 4
        %v957 = vsel %vm944, %v956, %v935
        %v958 = vrot.slane %v935, 4
        %v959 = vsel %vm944, %v941, %v958
        %v961 = vunpack.c.l.s4 1983009808
        %v962 = vunpack.c.0.s8 %v961
        %v963 = vperm.slane %v957, %v962
        %v965 = vunpack.c.l.s4 1983009808
        %v966 = vunpack.c.0.s8 %v965
        %v967 = vperm.slane %v959, %v966
        %v968 = vrot.slane %v963, 4
        %v969 = vsel %vm944, %v968, %v951
        %v970 = vrot.slane %v951, 4
        %v971 = vsel %vm944, %v963, %v970
        %v973 = vunpack.c.l.s4 1934713408
        %v974 = vunpack.c.0.s8 %v973
        %v975 = vperm.slane %v969, %v974
        %v977 = vunpack.c.l.s4 1934713408
        %v978 = vunpack.c.0.s8 %v977
        %v979 = vperm.slane %v971, %v978
        %v980 = vrot.slane %v967, 4
        %v981 = vsel %vm944, %v980, %v955
        %v982 = vrot.slane %v955, 4
        %v983 = vsel %vm944, %v967, %v982
        %v985 = vunpack.c.l.s4 1934713408
        %v986 = vunpack.c.0.s8 %v985
        %v987 = vperm.slane %v981, %v986
        %v989 = vunpack.c.l.s4 1934713408
        %v990 = vunpack.c.0.s8 %v989
        %v991 = vperm.slane %v983, %v990
        %v992 = vrot.slane %v975, 4
        %v993 = vsel %vm944, 0.0, %v992
        %v994 = vrot.slane %v979, 4
        %v995 = vsel %vm944, 0.0, %v994
        %v996 = vrot.slane %v987, 4
        %v997 = vsel %vm944, 0.0, %v996
        %v998 = vrot.slane %v991, 4
        %v999 = vsel %vm944, 0.0, %v998
        %v1000 = vsel %vm944, %v994, %v975
        %v1002 = vunpack.c.l.s4 1983009808
        %v1003 = vunpack.c.0.s8 %v1002
        %v1004 = vperm.slane %v1000, %v1003
        %v1005 = vrot.slane %v995, 4
        %v1006 = vsel %vm944, %v1005, %v993
        %v1008 = vunpack.c.l.s4 1983009808
        %v1009 = vunpack.c.0.s8 %v1008
        %v1010 = vperm.slane %v1006, %v1009
        %v1011 = vsel %vm944, %v998, %v987
        %v1013 = vunpack.c.l.s4 1983009808
        %v1014 = vunpack.c.0.s8 %v1013
        %v1015 = vperm.slane %v1011, %v1014
        %v1016 = vrot.slane %v999, 4
        %v1017 = vsel %vm944, %v1016, %v997
        %v1019 = vunpack.c.l.s4 1983009808
        %v1020 = vunpack.c.0.s8 %v1019
        %v1021 = vperm.slane %v1017, %v1020
        %v1022 = vrot.slane %v1010, 4
        %v1023 = vsel %vm944, %v1022, %v1004
        %v1024 = vrot.slane %v1004, 4
        %v1025 = vsel %vm944, %v1010, %v1024
        %v1027 = vunpack.c.l.s4 1934713408
        %v1028 = vunpack.c.0.s8 %v1027
        %v1029 = vperm.slane %v1023, %v1028
        %v1031 = vunpack.c.l.s4 1934713408
        %v1032 = vunpack.c.0.s8 %v1031
        %v1033 = vperm.slane %v1025, %v1032
        %v1034 = vrot.slane %v1021, 4
        %v1035 = vsel %vm944, %v1034, %v1015
        %v1036 = vrot.slane %v1015, 4
        %v1037 = vsel %vm944, %v1021, %v1036
        %v1039 = vunpack.c.l.s4 1934713408
        %v1040 = vunpack.c.0.s8 %v1039
        %v1041 = vperm.slane %v1035, %v1040
        %v1043 = vunpack.c.l.s4 1934713408
        %v1044 = vunpack.c.0.s8 %v1043
        %v1045 = vperm.slane %v1037, %v1044
        %v1046 = vrot.slane %v1041, 4
        %v1047 = vsel %vm944, %v1046, %v1029
        %v1048 = vrot.slane %v1029, 4
        %v1049 = vsel %vm944, %v1041, %v1048
        %v1050 = vrot.slane %v1045, 4
        %v1051 = vsel %vm944, %v1050, %v1033
        %v1052 = vrot.slane %v1033, 4
        %v1053 = vsel %vm944, %v1045, %v1052
        %v1054 = vld [vmem:[#allocation2] sm:$0xff]
        %v1055 = vld [vmem:[#allocation2 + $0x8] sm:$0xff]
        %v1056 = vld [vmem:[#allocation2 + $0x10] sm:$0xff]
        %v1057 = vld [vmem:[#allocation2 + $0x18] sm:$0xff]
        %v1058 = vld [vmem:[#allocation3] sm:$0xff]
        %v1059 = vld [vmem:[#allocation3 + $0x8] sm:$0xff]
        %v1060 = vld [vmem:[#allocation3 + $0x10] sm:$0xff]
        %v1061 = vld [vmem:[#allocation3 + $0x18] sm:$0xff]
        %v1062 = vld [vmem:[%s480] sm:$0x1]
        %v1064 = vperm.slane %v1062, 0
        %vm1066 = vcmask 64512
        %v1068 = vsel %vm1066, %v1047, 0
        %v1071 = vsel %vm1066, %v1054, 0
        %1073 = vmatpush.xpose.msra.mxu0 0.0
        %1074 = vmatpush.xpose.msra.mxu0 0.0
        %1075 = vmatpush.xpose.msra.mxu0 0.0
        %1076 = vmatpush.xpose.msra.mxu0 0.0
        %1077 = vmatpush.xpose.msra.mxu0 0.0
        %1078 = vmatpush.xpose.msra.mxu0 0.0
        %1079 = vmatpush.xpose.msra.mxu0 0.0
        %1080 = vmatpush.xpose.msra.mxu0 0.0
        %1081 = vmatpush.xpose.msra.mxu0 0.0
        %1082 = vmatpush.xpose.msra.mxu0 0.0
        %1083 = vmatpush.xpose.msra.mxu0 0.0
        %1084 = vmatpush.xpose.msra.mxu0 0.0
        %1085 = vmatpush.xpose.msra.mxu0 0.0
        %1086 = vmatpush.xpose.msra.mxu0 0.0
        %1087 = vmatpush.xpose.msra.mxu0 0.0
        %1088 = vmatpush.xpose.msra.mxu0 %v1071
        %1089 = vmatmul.f32.gmra.mxu0 %v1068
        %v1090 = vpop.f32.mrf.mxu0
        %v1091 = vadd.f32 %v1064, %v1090
        %1092 = vdwg.mxu0
        %v1094 = vsel %vm1066, %v1049, 0
        %v1097 = vsel %vm1066, %v1055, 0
        %1099 = vmatpush.xpose.msra.mxu0 0.0
        %1100 = vmatpush.xpose.msra.mxu0 0.0
        %1101 = vmatpush.xpose.msra.mxu0 0.0
        %1102 = vmatpush.xpose.msra.mxu0 0.0
        %1103 = vmatpush.xpose.msra.mxu0 0.0
        %1104 = vmatpush.xpose.msra.mxu0 0.0
        %1105 = vmatpush.xpose.msra.mxu0 0.0
        %1106 = vmatpush.xpose.msra.mxu0 0.0
        %1107 = vmatpush.xpose.msra.mxu0 0.0
        %1108 = vmatpush.xpose.msra.mxu0 0.0
        %1109 = vmatpush.xpose.msra.mxu0 0.0
        %1110 = vmatpush.xpose.msra.mxu0 0.0
        %1111 = vmatpush.xpose.msra.mxu0 0.0
        %1112 = vmatpush.xpose.msra.mxu0 0.0
        %1113 = vmatpush.xpose.msra.mxu0 0.0
        %1114 = vmatpush.xpose.msra.mxu0 %v1097
        %1115 = vmatmul.f32.gmra.mxu0 %v1094
        %v1116 = vpop.f32.mrf.mxu0
        %v1117 = vadd.f32 %v1064, %v1116
        %1118 = vdwg.mxu0
        %v1120 = vsel %vm1066, %v1051, 0
        %v1123 = vsel %vm1066, %v1056, 0
        %1125 = vmatpush.xpose.msra.mxu0 0.0
        %1126 = vmatpush.xpose.msra.mxu0 0.0
        %1127 = vmatpush.xpose.msra.mxu0 0.0
        %1128 = vmatpush.xpose.msra.mxu0 0.0
        %1129 = vmatpush.xpose.msra.mxu0 0.0
        %1130 = vmatpush.xpose.msra.mxu0 0.0
        %1131 = vmatpush.xpose.msra.mxu0 0.0
        %1132 = vmatpush.xpose.msra.mxu0 0.0
        %1133 = vmatpush.xpose.msra.mxu0 0.0
        %1134 = vmatpush.xpose.msra.mxu0 0.0
        %1135 = vmatpush.xpose.msra.mxu0 0.0
        %1136 = vmatpush.xpose.msra.mxu0 0.0
        %1137 = vmatpush.xpose.msra.mxu0 0.0
        %1138 = vmatpush.xpose.msra.mxu0 0.0
        %1139 = vmatpush.xpose.msra.mxu0 0.0
        %1140 = vmatpush.xpose.msra.mxu0 %v1123
        %1141 = vmatmul.f32.gmra.mxu0 %v1120
        %v1142 = vpop.f32.mrf.mxu0
        %v1143 = vadd.f32 %v1064, %v1142
        %1144 = vdwg.mxu0
        %v1146 = vsel %vm1066, %v1053, 0
        %v1149 = vsel %vm1066, %v1057, 0
        %1151 = vmatpush.xpose.msra.mxu0 0.0
        %1152 = vmatpush.xpose.msra.mxu0 0.0
        %1153 = vmatpush.xpose.msra.mxu0 0.0
        %1154 = vmatpush.xpose.msra.mxu0 0.0
        %1155 = vmatpush.xpose.msra.mxu0 0.0
        %1156 = vmatpush.xpose.msra.mxu0 0.0
        %1157 = vmatpush.xpose.msra.mxu0 0.0
        %1158 = vmatpush.xpose.msra.mxu0 0.0
        %1159 = vmatpush.xpose.msra.mxu0 0.0
        %1160 = vmatpush.xpose.msra.mxu0 0.0
        %1161 = vmatpush.xpose.msra.mxu0 0.0
        %1162 = vmatpush.xpose.msra.mxu0 0.0
        %1163 = vmatpush.xpose.msra.mxu0 0.0
        %1164 = vmatpush.xpose.msra.mxu0 0.0
        %1165 = vmatpush.xpose.msra.mxu0 0.0
        %1166 = vmatpush.xpose.msra.mxu0 %v1149
        %1167 = vmatmul.f32.gmra.mxu0 %v1146
        %v1168 = vpop.f32.mrf.mxu0
        %v1169 = vadd.f32 %v1064, %v1168
        %1170 = vdwg.mxu0
        %v1171 = vsel %vm1066, %v1091, -inf
        %1172 = vmax.xlane.f32.xlu0 %v1171
        %v1173 = vpop.xlane.xlu0 %1172
        %v1174 = vsel %vm1066, %v1117, -inf
        %1175 = vmax.xlane.f32.xlu0 %v1174
        %v1176 = vpop.xlane.xlu0 %1175
        %v1177 = vsel %vm1066, %v1143, -inf
        %1178 = vmax.xlane.f32.xlu0 %v1177
        %v1179 = vpop.xlane.xlu0 %1178
        %v1180 = vsel %vm1066, %v1169, -inf
        %1181 = vmax.xlane.f32.xlu0 %v1180
        %v1182 = vpop.xlane.xlu0 %1181
        %v1183 = vsub.f32 %v1091, %v1173
        %v1184 = vsub.f32 %v1117, %v1176
        %v1185 = vsub.f32 %v1143, %v1179
        %v1186 = vsub.f32 %v1169, %v1182
        %v1187 = vmul.f32 %v1183, 1.442695
        %v1188 = vpow.pop %v1187
        %v1189 = vmul.f32 %v1184, 1.442695
        %v1190 = vpow.pop %v1189
        %v1191 = vmul.f32 %v1185, 1.442695
        %v1192 = vpow.pop %v1191
        %v1193 = vmul.f32 %v1186, 1.442695
        %v1194 = vpow.pop %v1193
        %v1195 = vsel %vm1066, %v1188, 0.0
        %1196 = vadd.xlane.f32.xlu0 %v1195
        %v1197 = vpop.xlane.xlu0 %1196
        %v1198 = vsel %vm1066, %v1190, 0.0
        %1199 = vadd.xlane.f32.xlu0 %v1198
        %v1200 = vpop.xlane.xlu0 %1199
        %v1201 = vsel %vm1066, %v1192, 0.0
        %1202 = vadd.xlane.f32.xlu0 %v1201
        %v1203 = vpop.xlane.xlu0 %1202
        %v1204 = vsel %vm1066, %v1194, 0.0
        %1205 = vadd.xlane.f32.xlu0 %v1204
        %v1206 = vpop.xlane.xlu0 %1205
        %v1207 = vrcp.pop %v1197
        %v1208 = vrcp.pop %v1200
        %v1209 = vrcp.pop %v1203
        %v1210 = vrcp.pop %v1206
        %v1211 = vmul.f32 %v1188, %v1207
        %v1212 = vmul.f32 %v1190, %v1208
        %v1213 = vmul.f32 %v1192, %v1209
        %v1214 = vmul.f32 %v1194, %v1210
        %v1216 = vsel %vm1066, %v1211, 0
        %1218 = vmatpush.msra.mxu0 0.0
        %1219 = vmatpush.msra.mxu0 0.0
        %1220 = vmatpush.msra.mxu0 0.0
        %1221 = vmatpush.msra.mxu0 0.0
        %1222 = vmatpush.msra.mxu0 0.0
        %1223 = vmatpush.msra.mxu0 0.0
        %1224 = vmatpush.msra.mxu0 0.0
        %1225 = vmatpush.msra.mxu0 0.0
        %1226 = vmatpush.msra.mxu0 0.0
        %1227 = vmatpush.msra.mxu0 0.0
        %1228 = vmatpush.msra.mxu0 0.0
        %1229 = vmatpush.msra.mxu0 0.0
        %1230 = vmatpush.msra.mxu0 0.0
        %1231 = vmatpush.msra.mxu0 0.0
        %1232 = vmatpush.msra.mxu0 0.0
        %1233 = vmatpush.msra.mxu0 %v1058
        %1234 = vmatmul.f32.gmra.mxu0 %v1216
        %v1235 = vpop.f32.mrf.mxu0
        %v1236 = vadd.f32 0.0, %v1235
        %1237 = vdwg.mxu0
        %v1239 = vsel %vm1066, %v1212, 0
        %1241 = vmatpush.msra.mxu0 0.0
        %1242 = vmatpush.msra.mxu0 0.0
        %1243 = vmatpush.msra.mxu0 0.0
        %1244 = vmatpush.msra.mxu0 0.0
        %1245 = vmatpush.msra.mxu0 0.0
        %1246 = vmatpush.msra.mxu0 0.0
        %1247 = vmatpush.msra.mxu0 0.0
        %1248 = vmatpush.msra.mxu0 0.0
        %1249 = vmatpush.msra.mxu0 0.0
        %1250 = vmatpush.msra.mxu0 0.0
        %1251 = vmatpush.msra.mxu0 0.0
        %1252 = vmatpush.msra.mxu0 0.0
        %1253 = vmatpush.msra.mxu0 0.0
        %1254 = vmatpush.msra.mxu0 0.0
        %1255 = vmatpush.msra.mxu0 0.0
        %1256 = vmatpush.msra.mxu0 %v1059
        %1257 = vmatmul.f32.gmra.mxu0 %v1239
        %v1258 = vpop.f32.mrf.mxu0
        %v1259 = vadd.f32 0.0, %v1258
        %1260 = vdwg.mxu0
        %v1262 = vsel %vm1066, %v1213, 0
        %1264 = vmatpush.msra.mxu0 0.0
        %1265 = vmatpush.msra.mxu0 0.0
        %1266 = vmatpush.msra.mxu0 0.0
        %1267 = vmatpush.msra.mxu0 0.0
        %1268 = vmatpush.msra.mxu0 0.0
        %1269 = vmatpush.msra.mxu0 0.0
        %1270 = vmatpush.msra.mxu0 0.0
        %1271 = vmatpush.msra.mxu0 0.0
        %1272 = vmatpush.msra.mxu0 0.0
        %1273 = vmatpush.msra.mxu0 0.0
        %1274 = vmatpush.msra.mxu0 0.0
        %1275 = vmatpush.msra.mxu0 0.0
        %1276 = vmatpush.msra.mxu0 0.0
        %1277 = vmatpush.msra.mxu0 0.0
        %1278 = vmatpush.msra.mxu0 0.0
        %1279 = vmatpush.msra.mxu0 %v1060
        %1280 = vmatmul.f32.gmra.mxu0 %v1262
        %v1281 = vpop.f32.mrf.mxu0
        %v1282 = vadd.f32 0.0, %v1281
        %1283 = vdwg.mxu0
        %v1285 = vsel %vm1066, %v1214, 0
        %1287 = vmatpush.msra.mxu0 0.0
        %1288 = vmatpush.msra.mxu0 0.0
        %1289 = vmatpush.msra.mxu0 0.0
        %1290 = vmatpush.msra.mxu0 0.0
        %1291 = vmatpush.msra.mxu0 0.0
        %1292 = vmatpush.msra.mxu0 0.0
        %1293 = vmatpush.msra.mxu0 0.0
        %1294 = vmatpush.msra.mxu0 0.0
        %1295 = vmatpush.msra.mxu0 0.0
        %1296 = vmatpush.msra.mxu0 0.0
        %1297 = vmatpush.msra.mxu0 0.0
        %1298 = vmatpush.msra.mxu0 0.0
        %1299 = vmatpush.msra.mxu0 0.0
        %1300 = vmatpush.msra.mxu0 0.0
        %1301 = vmatpush.msra.mxu0 0.0
        %1302 = vmatpush.msra.mxu0 %v1061
        %1303 = vmatmul.f32.gmra.mxu0 %v1285
        %v1304 = vpop.f32.mrf.mxu0
        %v1305 = vadd.f32 0.0, %v1304
        %1306 = vdwg.mxu0
        %v1307 = vrot.slane %v1282, 4
        %v1308 = vsel %vm944, %v1307, %v1236
        %v1309 = vrot.slane %v1236, 4
        %v1310 = vsel %vm944, %v1282, %v1309
        %v1312 = vunpack.c.l.s4 1983009808
        %v1313 = vunpack.c.0.s8 %v1312
        %v1314 = vperm.slane %v1308, %v1313
        %v1316 = vunpack.c.l.s4 1983009808
        %v1317 = vunpack.c.0.s8 %v1316
        %v1318 = vperm.slane %v1310, %v1317
        %v1319 = vrot.slane %v1305, 4
        %v1320 = vsel %vm944, %v1319, %v1259
        %v1321 = vrot.slane %v1259, 4
        %v1322 = vsel %vm944, %v1305, %v1321
        %v1324 = vunpack.c.l.s4 1983009808
        %v1325 = vunpack.c.0.s8 %v1324
        %v1326 = vperm.slane %v1320, %v1325
        %v1328 = vunpack.c.l.s4 1983009808
        %v1329 = vunpack.c.0.s8 %v1328
        %v1330 = vperm.slane %v1322, %v1329
        %v1331 = vrot.slane %v1326, 4
        %v1332 = vsel %vm944, %v1331, %v1314
        %v1333 = vrot.slane %v1314, 4
        %v1334 = vsel %vm944, %v1326, %v1333
        %v1336 = vunpack.c.l.s4 1934713408
        %v1337 = vunpack.c.0.s8 %v1336
        %v1338 = vperm.slane %v1332, %v1337
        %v1340 = vunpack.c.l.s4 1934713408
        %v1341 = vunpack.c.0.s8 %v1340
        %v1342 = vperm.slane %v1334, %v1341
        %v1343 = vrot.slane %v1330, 4
        %v1344 = vsel %vm944, %v1343, %v1318
        %v1345 = vrot.slane %v1318, 4
        %v1346 = vsel %vm944, %v1330, %v1345
        %v1348 = vunpack.c.l.s4 1934713408
        %v1349 = vunpack.c.0.s8 %v1348
        %v1350 = vperm.slane %v1344, %v1349
        %v1352 = vunpack.c.l.s4 1934713408
        %v1353 = vunpack.c.0.s8 %v1352
        %v1354 = vperm.slane %v1346, %v1353
        %v1355 = vrot.slane %v1338, 4
        %v1356 = vsel %vm944, 0.0, %v1355
        %v1357 = vrot.slane %v1342, 4
        %v1358 = vsel %vm944, 0.0, %v1357
        %v1359 = vrot.slane %v1350, 4
        %v1360 = vsel %vm944, 0.0, %v1359
        %v1361 = vrot.slane %v1354, 4
        %v1362 = vsel %vm944, 0.0, %v1361
        %v1363 = vsel %vm944, %v1357, %v1338
        %v1365 = vunpack.c.l.s4 1983009808
        %v1366 = vunpack.c.0.s8 %v1365
        %v1367 = vperm.slane %v1363, %v1366
        %v1368 = vrot.slane %v1358, 4
        %v1369 = vsel %vm944, %v1368, %v1356
        %v1371 = vunpack.c.l.s4 1983009808
        %v1372 = vunpack.c.0.s8 %v1371
        %v1373 = vperm.slane %v1369, %v1372
        %v1374 = vsel %vm944, %v1361, %v1350
        %v1376 = vunpack.c.l.s4 1983009808
        %v1377 = vunpack.c.0.s8 %v1376
        %v1378 = vperm.slane %v1374, %v1377
        %v1379 = vrot.slane %v1362, 4
        %v1380 = vsel %vm944, %v1379, %v1360
        %v1382 = vunpack.c.l.s4 1983009808
        %v1383 = vunpack.c.0.s8 %v1382
        %v1384 = vperm.slane %v1380, %v1383
        %v1385 = vrot.slane %v1373, 4
        %v1386 = vsel %vm944, %v1385, %v1367
        %v1387 = vrot.slane %v1367, 4
        %v1388 = vsel %vm944, %v1373, %v1387
        %v1390 = vunpack.c.l.s4 1934713408
        %v1391 = vunpack.c.0.s8 %v1390
        %v1392 = vperm.slane %v1386, %v1391
        %v1394 = vunpack.c.l.s4 1934713408
        %v1395 = vunpack.c.0.s8 %v1394
        %v1396 = vperm.slane %v1388, %v1395
        %v1397 = vrot.slane %v1384, 4
        %v1398 = vsel %vm944, %v1397, %v1378
        %v1399 = vrot.slane %v1378, 4
        %v1400 = vsel %vm944, %v1384, %v1399
        %v1402 = vunpack.c.l.s4 1934713408
        %v1403 = vunpack.c.0.s8 %v1402
        %v1404 = vperm.slane %v1398, %v1403
        %v1406 = vunpack.c.l.s4 1934713408
        %v1407 = vunpack.c.0.s8 %v1406
        %v1408 = vperm.slane %v1400, %v1407
        %v1409 = vrot.slane %v1404, 4
        %v1410 = vsel %vm944, %v1409, %v1392
        %v1411 = vrot.slane %v1392, 4
        %v1412 = vsel %vm944, %v1404, %v1411
        %v1413 = vrot.slane %v1408, 4
        %v1414 = vsel %vm944, %v1413, %v1396
        %v1415 = vrot.slane %v1396, 4
        %v1416 = vsel %vm944, %v1408, %v1415
        %1418 = vrot.lane.b32.xlu0 %v1412, 8
        %v1419 = vpop.permute.xlu0 %1418
        %1422 = vrot.lane.b32.xlu0 %v1414, 16
        %v1423 = vpop.permute.xlu0 %1422
        %1426 = vrot.lane.b32.xlu0 %v1416, 24
        %v1427 = vpop.permute.xlu0 %1426
        %v1429 = vsel %vm1066, %v1410, %v1419
        %vm1430 = vcmask 130048
        %v1431 = vsel %vm1430, %v1429, %v1423
        %vm1432 = vcmask 195584
        %v1433 = vsel %vm1432, %v1431, %v1427
        %v1434 = vld [vmem:[#allocation13] sm:$0xff]
        %v1435 = vld [vmem:[#allocation13 + $0x8] sm:$0xff]
        %v1436 = vld [vmem:[#allocation13 + $0x10] sm:$0xff]
        %v1437 = vld [vmem:[#allocation13 + $0x18] sm:$0xff]
        %v1438 = vld [vmem:[%s9] sm:$0x1]
        %v1440 = vperm.slane %v1438, 0
        %v1443 = vsel %vm896, %v1433, 0
        %v1446 = vsel %vm896, %v1434, 0
        %v1449 = vsel %vm896, %v1435, 0
        %v1452 = vsel %vm896, %v1436, 0
        %v1455 = vsel %vm896, %v1437, 0
        %1457 = vmatpush.xpose.msra.mxu0 0.0
        %1458 = vmatpush.xpose.msra.mxu0 0.0
        %1459 = vmatpush.xpose.msra.mxu0 0.0
        %1460 = vmatpush.xpose.msra.mxu0 0.0
        %1461 = vmatpush.xpose.msra.mxu0 0.0
        %1462 = vmatpush.xpose.msra.mxu0 0.0
        %1463 = vmatpush.xpose.msra.mxu0 0.0
        %1464 = vmatpush.xpose.msra.mxu0 0.0
        %1465 = vmatpush.xpose.msra.mxu0 0.0
        %1466 = vmatpush.xpose.msra.mxu0 0.0
        %1467 = vmatpush.xpose.msra.mxu0 0.0
        %1468 = vmatpush.xpose.msra.mxu0 0.0
        %1469 = vmatpush.xpose.msra.mxu0 %v1455
        %1470 = vmatpush.xpose.msra.mxu0 %v1452
        %1471 = vmatpush.xpose.msra.mxu0 %v1449
        %1472 = vmatpush.xpose.msra.mxu0 %v1446
        %1473 = vmatmul.f32.gmra.mxu0 %v1443
        %v1474 = vpop.f32.mrf.mxu0
        %v1475 = vadd.f32 %v1440, %v1474
        %1476 = vdwg.mxu0
        %v1477 = vadd.f32 %v1475, %v887
        %v1478 = vsel %vm896, %v1477, 0.0
        %1479 = vadd.xlane.f32.xlu0 %v1478
        %v1480 = vpop.xlane.xlu0 %1479
        %v1481 = vrcp.pop 32.0
        %v1482 = vmul.f32 32.0, %v1481
        %v1483 = vsub.f32 1.0, %v1482
        %v1484 = vmul.f32 %v1481, %v1483
        %v1485 = vadd.f32 %v1481, %v1484
        %vm1486 = vweird.f32 %v1481
        %v1487 = vsel %vm1486, %v1481, %v1485
        %v1488 = vmul.f32 %v1480, %v1487
        %v1489 = vsub.f32 %v1477, %v1488
        %v1490 = vmul.f32 %v1489, %v1489
        %v1491 = vsel %vm896, %v1490, 0.0
        %1492 = vadd.xlane.f32.xlu0 %v1491
        %v1493 = vpop.xlane.xlu0 %1492
        %v1494 = vmul.f32 %v1493, %v1487
        %v1495 = vadd.f32 %v1494, 1e-12
        %v1496 = vrsqrt.pop %v1495
        %v1497 = vmul.f32 %v1496, %v1495
        %v1498 = vmul.f32 %v1497, %v1496
        %v1499 = vmul.f32 0.5, %v1498
        %v1500 = vsub.f32 1.5, %v1499
        %v1501 = vmul.f32 %v1496, %v1500
        %vm1502 = vweird.f32 %v1495
        %vm1503 = vweird.f32 %v1496
        %vm1504 = vmor %vm1502, %vm1503
        %v1505 = vsel %vm1504, %v1496, %v1501
        %v1506 = vmul.f32 %v1489, %v1505
        %v1507 = vld [vmem:[%s10] sm:$0x1]
        %v1509 = vperm.slane %v1507, 0
        %v1511 = vmul.f32 %v1506, %v1509
        %v1512 = vld [vmem:[%s11] sm:$0x1]
        %v1514 = vperm.slane %v1512, 0
        %v1516 = vadd.f32 %v1511, %v1514
        %1517 = vst.msk [vmem:[%s545] sm:$0xff] %vm896, %v1516
        %s1518 = sand.u32 %s318, 1
        %s1519 = scalar_lea.sflag [#allocation6], %s1518
        %s1520 = sand.u32 %s318, 1
        %s1521 = smul.addr %s1520, 8
        %s1522 = scalar_lea.vmem [#allocation15], %s1521
        // Predicated region
        $region97: #{tpu_custom_call.1} parent=67 // pred_check
          %p1523 = pneg %p328
        $region98: #{tpu_custom_call.1} parent=67 // pred_check_branch
          %1525 = sbr.rel (%p1523) target = $region100
        $region99: #{tpu_custom_call.1} parent=67 // pred_region
          %1527 = vsyncadd %s1519, 0
          %s1528 = sadd.s32 %s39, %s38
          %s1529 = smul.addr %s1528, 8
          %s1530 = scalar_lea.hbm %s12, %s1529
          %s1532 = sshll.u32 %s1522, 4
          %s1533 = int_to_ptr.vmem [resolvable:$true] %s1532
          %s1534 = sshll.u32 %s1530, 4
          %s1535 = int_to_ptr.hbm [resolvable:$true] %s1534
          %1537 = dma.vmem_to_hbm [thread:$0]  %s1533, 128, %s1535, %s1519
        $region100: #{tpu_custom_call.1} parent=67 // pred_fallthru
          _
      $region68: #{tpu_custom_call.1} parent=5 // pred_fallthru
        _
      %p1538 = scmp.le.s32.totalorder 2, %s29
      // Predicated region
      $region101: #{tpu_custom_call.1} parent=5 // pred_check
        %p1539 = pneg %p1538
      $region102: #{tpu_custom_call.1} parent=5 // pred_check_branch
        %1541 = sbr.rel (%p1539) target = $region104
      $region103: #{tpu_custom_call.1} parent=5 // pred_region
        %s1542 = ssub.s32 %s29, 2
        // Predicated region
        $region105: #{tpu_custom_call.1} parent=103 // pred_check
          %p1543 = pneg %p334
        $region106: #{tpu_custom_call.1} parent=103 // pred_check_branch
          %1545 = sbr.rel (%p1543) target = $region108
        $region107: #{tpu_custom_call.1} parent=103 // pred_region
          %s1546 = sand.u32 %s319, 1
          %s1547 = scalar_lea.sflag [#allocation6], %s1546
          %s1548 = sand.u32 %s319, 1
          %s1549 = smul.addr %s1548, 8
          %s1550 = scalar_lea.vmem [#allocation15], %s1549
          %1552 = dma.done %s1547, 128
        $region108: #{tpu_custom_call.1} parent=103 // pred_fallthru
          _
      $region104: #{tpu_custom_call.1} parent=5 // pred_fallthru
        _
    $region6: #{tpu_custom_call.1} parent=1 // loop_footer
      %s33 = sadd.s32 1, %s29
    $region7: #{tpu_custom_call.1} parent=1 // loop_footer_branch
      %28 = sbr.rel target = $region3
    $region8: #{tpu_custom_call.1} parent=1 // loop_exit
      _
    %1553 = vsyncpa [#allocation5], 1
    %s1554 = scalar_lea.sflag [#allocation5], 1
    %1555 = vsyncpa %s1554, 1
    %1556 = vsyncpa [#allocation8], 1
    %s1557 = scalar_lea.sflag [#allocation8], 1
    %1558 = vsyncpa %s1557, 1
    %1559 = vsyncpa [#allocation11], 1
    %1560 = vsyncpa [#allocation14], 1
    %1561 = vsyncpa [#allocation6], 1
    %s1562 = scalar_lea.sflag [#allocation6], 1
    %1563 = vsyncpa %s1562, 1

</llo_original>
